<compile_context>
chip_gen: v6e
topology: v6e:2x2x1
jax: 0.10.0
libtpu: 0.0.40
codegen_flags: <defaults>
</compile_context>

<pallas_src>
import functools

import jax
import jax.numpy as jnp
from jax.experimental import pallas as pl
from jax.experimental.pallas import tpu as pltpu

# ---------------- configuration (EEGNetConfig analog, small shapes) ----------------
NODE_SIZE = 4        # C : EEG electrodes
TIME_SIZE = 64       # T : time samples
NUM_CLASSES = 3
FREQUENCY = 16       # sampling rate -> frequency conv length = FREQUENCY // 2
NUM_KERNELS = 8      # F1
D = 2                # depth multiplier
P1 = 4
P2 = 8

F1 = NUM_KERNELS
F2 = NUM_KERNELS * D
C = NODE_SIZE
T = TIME_SIZE
KF = FREQUENCY // 2              # frequency (temporal) conv kernel length
KT = 16                          # separable temporal conv kernel length (EEGNet default)
T1 = T // P1
T2 = T1 // P2
HIDDEN = F2 * T2                 # == num_kernels * D * (T // p1 // p2)
BN_EPS = 1e-5

# torch Conv2d(padding='same'): left = total//2, extra padding goes right
PADL_F = (KF - 1) // 2
PADR_F = (KF - 1) - PADL_F
PADL_T = (KT - 1) // 2

TPAD = T + KF - 1                # padded time length fed to the kernel
K1 = C * TPAD                    # flattened input width per sample (= 284)


def _round_up(x, m):
    return ((x + m - 1) // m) * m


K1_PAD = _round_up(K1, 128)      # MXU-friendly contraction dim (= 384)
NCLS_PAD = 128                   # lane-dense class/output dim


# ===================== the single fused kernel =====================
def _elu(x):
    # f32 math; exp goes to the EUP slot, compare/select to the VPU.
    return jnp.where(x > 0, x, jnp.exp(jnp.minimum(x, 0.0)) - 1.0)


def _eegnet_fused_kernel(x_ref, w1_ref, b1_ref, w2_ref, b2_ref, w3_ref, b3_ref,
                         out_ref):
    # x_ref: (Bb, K1_PAD) bf16 — one batch block, batch on sublanes / matmul-M.
    # Stage A: freq conv + BN1 + spatial depthwise conv + BN2  (one MXU matmul)
    h = jnp.dot(x_ref[...], w1_ref[...],
                preferred_element_type=jnp.float32) + b1_ref[...]     # (Bb, F2*T) f32
    h = _elu(h)                                                        # ELU (f32)
    # Stage B: AvgPool(p1) + depthwise temporal conv + pointwise conv + BN3
    h = jnp.dot(h.astype(jnp.bfloat16), w2_ref[...],
                preferred_element_type=jnp.float32) + b2_ref[...]     # (Bb, F2*T1) f32
    h = _elu(h)                                                        # ELU (f32)
    # Stage C: AvgPool(p2) + FC   (Dropout = identity at inference)
    z = jnp.dot(h.astype(jnp.bfloat16), w3_ref[...],
                preferred_element_type=jnp.float32) + b3_ref[...]     # (Bb, NCLS_PAD)
    # softmax over classes (padded classes carry -1e30 bias -> exp == 0)
    z = z - jnp.max(z, axis=-1, keepdims=True)
    e = jnp.exp(z)
    out_ref[...] = e / jnp.sum(e, axis=-1, keepdims=True)


def _full_spec(shape):
    n = len(shape)
    return pl.BlockSpec(shape, lambda i, _n=n: (0,) * _n)


def _pick_block_batch(B, cap=512):
    """Per-step batch block: multiple of 16 (bf16 sublanes), <= cap, and
    (for larger batches) at least 2 grid steps so v7x's 2 TCs both get work."""
    if B <= 16:
        return 16
    bb = _round_up(pl.cdiv(B, 2), 16)
    return min(bb, cap)


def eegnet_pallas_probs(xflat, params):
    B = xflat.shape[0]
    bb = _pick_block_batch(B)
    b_pad = _round_up(B, bb)                       # pad batch instead of giant block
    if b_pad != B:
        xflat = jnp.pad(xflat, ((0, b_pad - B), (0, 0)))
    grid = (b_pad // bb,)
    out = pl.pallas_call(
        _eegnet_fused_kernel,
        out_shape=jax.ShapeDtypeStruct((b_pad, NCLS_PAD), jnp.float32),
        grid_spec=pltpu.PrefetchScalarGridSpec(
            num_scalar_prefetch=0,
            grid=grid,
            in_specs=[
                pl.BlockSpec((bb, K1_PAD), lambda i: (i, 0)),   # only input streams
                _full_spec((K1_PAD, F2 * T)),                   # resident weights
                _full_spec((1, F2 * T)),
                _full_spec((F2 * T, F2 * T1)),
                _full_spec((1, F2 * T1)),
                _full_spec((F2 * T1, NCLS_PAD)),
                _full_spec((1, NCLS_PAD)),
            ],
            out_specs=pl.BlockSpec((bb, NCLS_PAD), lambda i: (i, 0)),
        ),
        compiler_params=pltpu.CompilerParams(
            dimension_semantics=("parallel",),   # batch blocks independent
        ),
    )(xflat, params["w1"], params["b1"], params["w2"], params["b2"],
      params["w3"], params["b3"])
    return out[:B]                                 # drop batch padding


# ===================== parameter construction + folding (host-side glue) =====================
def fold_params(wf, s1, sh1, ws, s2, sh2, wtdw, wtpw, s3, sh3, fc_w, fc_b):
    """Fold raw conv / BN(eval) / pool / FC parameters into the three matmul weights."""
    f32 = jnp.float32
    bf16 = jnp.bfloat16

    # per-output-channel (g = f*D + d) views of the F1-indexed quantities
    wf_g = jnp.repeat(wf, D, axis=0)          # (F2, KF)   wf[g//D]
    s1_g = jnp.repeat(s1, D)                  # (F2,)
    sh1_g = jnp.repeat(sh1, D)                # (F2,)

    # ---- Stage A: freq conv + BN1 + spatial depthwise + BN2 ----
    # combined kernel  W1comb[g, c, k] and bias per g
    w1comb = (s2 * s1_g)[:, None, None] * ws[:, :, None] * wf_g[:, None, :]   # (F2,C,KF)
    bias1 = s2 * sh1_g * jnp.sum(ws, axis=1) + sh2                            # (F2,)
    # banded matrix: BigW1[c*TPAD+tp, g*T+t] = W1comb[g,c,tp-t] for 0<=tp-t<KF
    tp = jnp.arange(TPAD)
    tt = jnp.arange(T)
    k = tp[:, None] - tt[None, :]
    valid = ((k >= 0) & (k < KF)).astype(f32)
    kc = jnp.clip(k, 0, KF - 1)
    band = w1comb[:, :, kc] * valid[None, None]           # (F2, C, TPAD, T)
    w1 = band.transpose(1, 2, 0, 3).reshape(K1, F2 * T)   # (C*TPAD, F2*T)
    w1 = jnp.pad(w1, ((0, K1_PAD - K1), (0, 0))).astype(bf16)   # K padded to 384, bf16
    b1 = jnp.repeat(bias1, T)[None, :].astype(f32)        # (1, F2*T), f32

    # ---- Stage B: AvgPool(p1) + depthwise temporal conv ('same') + pointwise + BN3 ----
    ti = jnp.arange(T1)
    kk = ti[:, None] - ti[None, :] + PADL_T
    validk = ((kk >= 0) & (kk < KT)).astype(f32)
    kkc = jnp.clip(kk, 0, KT - 1)
    dwband = wtdw[:, kkc] * validk[None]                  # (F2(gi), T1(ti), T1(to))
    pw_s = s3[:, None] * wtpw                             # (F2(go), F2(gi))
    big2 = (dwband[:, :, None, :] * pw_s.T[:, None, :, None]
            ).reshape(F2 * T1, F2 * T1)                   # (gi*T1+ti, go*T1+to)
    pool_a = ((jnp.arange(T)[:, None] // P1) == jnp.arange(T1)[None, :]).astype(f32) / P1
    p1mat = jnp.kron(jnp.eye(F2, dtype=f32), pool_a)      # (F2*T, F2*T1)
    w2 = (p1mat @ big2).astype(bf16)                      # fold pool1, bf16
    b2 = jnp.repeat(sh3, T1)[None, :].astype(f32)         # (1, F2*T1), f32

    # ---- Stage C: AvgPool(p2) + FC ----
    pool_b = ((jnp.arange(T1)[:, None] // P2) == jnp.arange(T2)[None, :]).astype(f32) / P2
    p2mat = jnp.kron(jnp.eye(F2, dtype=f32), pool_b)      # (F2*T1, F2*T2) == (.., HIDDEN)
    w3 = p2mat @ fc_w.T                                    # (F2*T1, NUM_CLASSES)
    w3 = jnp.pad(w3, ((0, 0), (0, NCLS_PAD - NUM_CLASSES))).astype(bf16)  # lane-dense
    b3 = jnp.full((1, NCLS_PAD), -1e30, f32)               # padded classes -> exp == 0
    b3 = b3.at[0, :NUM_CLASSES].set(fc_b.astype(f32))

    return dict(w1=w1, b1=b1, w2=w2, b2=b2, w3=w3, b3=b3)


def init_params(key):
    ks = jax.random.split(key, 18)

    def bn_fold(kg, kb, km, kv, n):
        gamma = 1.0 + 0.1 * jax.random.normal(kg, (n,), jnp.float32)
        beta = 0.1 * jax.random.normal(kb, (n,), jnp.float32)
        mean = 0.1 * jax.random.normal(km, (n,), jnp.float32)
        var = 0.5 + jax.random.uniform(kv, (n,), jnp.float32)
        scale = gamma / jnp.sqrt(var + BN_EPS)
        shift = beta - mean * scale
        return scale, shift

    # frequency conv weight (torch: (F1, 1, 1, KF), bias=False) + BN(F1)
    wf = 0.2 * jax.random.normal(ks[0], (F1, KF), jnp.float32)
    s1, sh1 = bn_fold(ks[1], ks[2], ks[3], ks[4], F1)
    # spatial depthwise conv weight (torch: (F1*D, 1, C, 1), groups=F1) + BN(F2)
    ws = 0.2 * jax.random.normal(ks[5], (F2, C), jnp.float32)
    s2, sh2 = bn_fold(ks[6], ks[7], ks[8], ks[9], F2)
    # separable temporal conv: depthwise (F2,1,1,KT) + pointwise (F2,F2,1,1) + BN(F2)
    wtdw = 0.2 * jax.random.normal(ks[10], (F2, KT), jnp.float32)
    wtpw = 0.2 * jax.random.normal(ks[11], (F2, F2), jnp.float32)
    s3, sh3 = bn_fold(ks[12], ks[13], ks[14], ks[15], F2)
    # fc: Linear(HIDDEN, NUM_CLASSES)
    fc_w = 0.1 * jax.random.normal(ks[16], (NUM_CLASSES, HIDDEN), jnp.float32)
    fc_b = 0.1 * jax.random.normal(ks[17], (NUM_CLASSES,), jnp.float32)

    return fold_params(wf, s1, sh1, ws, s2, sh2, wtdw, wtpw, s3, sh3, fc_w, fc_b)


# ===================== forward (thin glue around one pallas_call) =====================
@functools.partial(jax.jit)
def eegnet_forward(params, time_series, labels):
    # time_series: (B, C, T) float32; torch does unsqueeze(1) -> NCHW (B,1,C,T)
    B = time_series.shape[0]
    xp = jnp.pad(time_series, ((0, 0), (0, 0), (PADL_F, PADR_F)))   # 'same' pad of freq conv
    xflat = xp.reshape(B, K1)                                       # (B, C*TPAD)
    xflat = jnp.pad(xflat, ((0, 0), (0, K1_PAD - K1)))              # MXU-aligned K
    xflat = xflat.astype(jnp.bfloat16)                              # bf16 MXU operand

    probs_pad = eegnet_pallas_probs(xflat, params)                  # (B, 128)
    probs = probs_pad[:, :NUM_CLASSES]                              # softmax output (B, 3)

    # CrossEntropyLoss applied to the softmax output (reproduces the reference
    # forward's double-softmax).  Scalar glue.
    logp = jax.nn.log_softmax(probs, axis=-1)
    loss = -jnp.mean(jnp.take_along_axis(logp, labels[:, None], axis=1))
    return probs, loss


if __name__ == "__main__":
    key = jax.random.PRNGKey(0)
    k_param, k_x, k_y = jax.random.split(key, 3)

    params = init_params(k_param)
    time_series = jax.random.normal(k_x, (2, NODE_SIZE, TIME_SIZE), jnp.float32)
    labels = jax.random.randint(k_y, (2,), 0, NUM_CLASSES)

    logits, loss = eegnet_forward(params, time_series, labels)
    jax.block_until_ready((logits, loss))

    assert logits.shape == (2, NUM_CLASSES)
    assert bool(jnp.all(jnp.isfinite(logits))) and bool(jnp.isfinite(loss))
    # probabilities over the 3 real classes should sum to ~1 (padded lanes are exactly 0)
    assert bool(jnp.all(jnp.abs(jnp.sum(logits, axis=-1) - 1.0) < 1e-3))
    print("KERNEL_OK")
</pallas_src>

<mosaic_0001>
module attributes {stable_mosaic.version = 11 : i64} {
  func.func @_eegnet_fused_kernel(%arg0: i32, %arg1: memref<16x384xbf16, #tpu.memory_space<vmem>>, %arg2: memref<384x1024xbf16, #tpu.memory_space<vmem>>, %arg3: memref<1x1024xf32, #tpu.memory_space<vmem>>, %arg4: memref<1024x256xbf16, #tpu.memory_space<vmem>>, %arg5: memref<1x256xf32, #tpu.memory_space<vmem>>, %arg6: memref<256x128xbf16, #tpu.memory_space<vmem>>, %arg7: memref<1x128xf32, #tpu.memory_space<vmem>>, %arg8: memref<16x128xf32, #tpu.memory_space<vmem>>) attributes {dimension_semantics = [#tpu.dimension_semantics<parallel>], iteration_bounds = array<i64: 1>, scalar_prefetch = 0 : i64, scratch_operands = 0 : i64, tpu.core_type = #tpu.core_type<tc>, window_params = [{transform_indices = @transform_0, window_bounds = array<i64: 16, 384>}, {pipeline_mode = #tpu.pipeline_mode<synchronous>, transform_indices = @transform_1, window_bounds = array<i64: 384, 1024>}, {pipeline_mode = #tpu.pipeline_mode<synchronous>, transform_indices = @transform_2, window_bounds = array<i64: 1, 1024>}, {pipeline_mode = #tpu.pipeline_mode<synchronous>, transform_indices = @transform_3, window_bounds = array<i64: 1024, 256>}, {pipeline_mode = #tpu.pipeline_mode<synchronous>, transform_indices = @transform_4, window_bounds = array<i64: 1, 256>}, {pipeline_mode = #tpu.pipeline_mode<synchronous>, transform_indices = @transform_5, window_bounds = array<i64: 256, 128>}, {pipeline_mode = #tpu.pipeline_mode<synchronous>, transform_indices = @transform_6, window_bounds = array<i64: 1, 128>}, {transform_indices = @transform_7, window_bounds = array<i64: 16, 128>}]} {
    %c0 = arith.constant 0 : index
    %c0_0 = arith.constant 0 : index
    %0 = vector.load %arg1[%c0, %c0_0] : memref<16x384xbf16, #tpu.memory_space<vmem>>, vector<16x384xbf16>
    %c0_1 = arith.constant 0 : index
    %c0_2 = arith.constant 0 : index
    %1 = vector.load %arg2[%c0_1, %c0_2] : memref<384x1024xbf16, #tpu.memory_space<vmem>>, vector<384x1024xbf16>
    %cst = arith.constant dense<0.000000e+00> : vector<16x1024xf32>
    %2 = tpu.matmul %0, %1, %cst {dimension_numbers = #tpu.dot_dimension_numbers<[1], [0], [0], [1], [0, 0, 1, 1], [], []>} : vector<16x384xbf16>, vector<384x1024xbf16>, vector<16x1024xf32> -> vector<16x1024xf32>
    %c0_3 = arith.constant 0 : index
    %c0_4 = arith.constant 0 : index
    %3 = vector.load %arg3[%c0_3, %c0_4] : memref<1x1024xf32, #tpu.memory_space<vmem>>, vector<1x1024xf32>
    %4 = vector.broadcast %3 : vector<1x1024xf32> to vector<16x1024xf32>
    %5 = arith.addf %2, %4 : vector<16x1024xf32>
    %cst_5 = arith.constant 0.000000e+00 : f32
    %6 = vector.broadcast %cst_5 : f32 to vector<16x1024xf32>
    %7 = arith.cmpf ogt, %5, %6 : vector<16x1024xf32>
    %cst_6 = arith.constant 0.000000e+00 : f32
    %8 = vector.broadcast %cst_6 : f32 to vector<16x1024xf32>
    %9 = arith.minimumf %5, %8 : vector<16x1024xf32>
    %10 = math.exp %9 : vector<16x1024xf32>
    %cst_7 = arith.constant 1.000000e+00 : f32
    %11 = vector.broadcast %cst_7 : f32 to vector<16x1024xf32>
    %12 = arith.subf %10, %11 : vector<16x1024xf32>
    %13 = arith.select %7, %5, %12 : vector<16x1024xi1>, vector<16x1024xf32>
    %14 = arith.truncf %13 : vector<16x1024xf32> to vector<16x1024xbf16>
    %c0_8 = arith.constant 0 : index
    %c0_9 = arith.constant 0 : index
    %15 = vector.load %arg4[%c0_8, %c0_9] : memref<1024x256xbf16, #tpu.memory_space<vmem>>, vector<1024x256xbf16>
    %cst_10 = arith.constant dense<0.000000e+00> : vector<16x256xf32>
    %16 = tpu.matmul %14, %15, %cst_10 {dimension_numbers = #tpu.dot_dimension_numbers<[1], [0], [0], [1], [0, 0, 1, 1], [], []>} : vector<16x1024xbf16>, vector<1024x256xbf16>, vector<16x256xf32> -> vector<16x256xf32>
    %c0_11 = arith.constant 0 : index
    %c0_12 = arith.constant 0 : index
    %17 = vector.load %arg5[%c0_11, %c0_12] : memref<1x256xf32, #tpu.memory_space<vmem>>, vector<1x256xf32>
    %18 = vector.broadcast %17 : vector<1x256xf32> to vector<16x256xf32>
    %19 = arith.addf %16, %18 : vector<16x256xf32>
    %cst_13 = arith.constant 0.000000e+00 : f32
    %20 = vector.broadcast %cst_13 : f32 to vector<16x256xf32>
    %21 = arith.cmpf ogt, %19, %20 : vector<16x256xf32>
    %cst_14 = arith.constant 0.000000e+00 : f32
    %22 = vector.broadcast %cst_14 : f32 to vector<16x256xf32>
    %23 = arith.minimumf %19, %22 : vector<16x256xf32>
    %24 = math.exp %23 : vector<16x256xf32>
    %cst_15 = arith.constant 1.000000e+00 : f32
    %25 = vector.broadcast %cst_15 : f32 to vector<16x256xf32>
    %26 = arith.subf %24, %25 : vector<16x256xf32>
    %27 = arith.select %21, %19, %26 : vector<16x256xi1>, vector<16x256xf32>
    %28 = arith.truncf %27 : vector<16x256xf32> to vector<16x256xbf16>
    %c0_16 = arith.constant 0 : index
    %c0_17 = arith.constant 0 : index
    %29 = vector.load %arg6[%c0_16, %c0_17] : memref<256x128xbf16, #tpu.memory_space<vmem>>, vector<256x128xbf16>
    %cst_18 = arith.constant dense<0.000000e+00> : vector<16x128xf32>
    %30 = tpu.matmul %28, %29, %cst_18 {dimension_numbers = #tpu.dot_dimension_numbers<[1], [0], [0], [1], [0, 0, 1, 1], [], []>} : vector<16x256xbf16>, vector<256x128xbf16>, vector<16x128xf32> -> vector<16x128xf32>
    %c0_19 = arith.constant 0 : index
    %c0_20 = arith.constant 0 : index
    %31 = vector.load %arg7[%c0_19, %c0_20] : memref<1x128xf32, #tpu.memory_space<vmem>>, vector<1x128xf32>
    %32 = vector.broadcast %31 : vector<1x128xf32> to vector<16x128xf32>
    %33 = arith.addf %30, %32 : vector<16x128xf32>
    %cst_21 = arith.constant dense<0xFF800000> : vector<16xf32>
    %34 = vector.multi_reduction <maximumf>, %33, %cst_21 [1] : vector<16x128xf32> to vector<16xf32>
    %35 = vector.shape_cast %34 : vector<16xf32> to vector<16x1xf32>
    %36 = vector.broadcast %35 : vector<16x1xf32> to vector<16x128xf32>
    %37 = arith.subf %33, %36 : vector<16x128xf32>
    %38 = math.exp %37 : vector<16x128xf32>
    %cst_22 = arith.constant dense<0.000000e+00> : vector<16xf32>
    %39 = vector.multi_reduction <add>, %38, %cst_22 [1] : vector<16x128xf32> to vector<16xf32>
    %40 = vector.shape_cast %39 : vector<16xf32> to vector<16x1xf32>
    %41 = vector.broadcast %40 : vector<16x1xf32> to vector<16x128xf32>
    %42 = arith.divf %38, %41 : vector<16x128xf32>
    %c0_23 = arith.constant 0 : index
    %c0_24 = arith.constant 0 : index
    %43 = vector.load %arg8[%c0_23, %c0_24] : memref<16x128xf32, #tpu.memory_space<vmem>>, vector<16x128xf32>
    tpu.vector_store %arg8[%c0_23, %c0_24], %42 {strides = array<i32>} : memref<16x128xf32, #tpu.memory_space<vmem>>, vector<16x128xf32>,
    return
  }
  func.func @transform_0(%arg0: i32) -> (i32, i32) {
    %c0_i32 = arith.constant 0 : i32
    %c0_i32_0 = arith.constant 0 : i32
    return %arg0, %c0_i32 : i32, i32
  }
  func.func @transform_1(%arg0: i32) -> (i32, i32) {
    %c0_i32 = arith.constant 0 : i32
    %c0_i32_0 = arith.constant 0 : i32
    %c0_i32_1 = arith.constant 0 : i32
    return %c0_i32, %c0_i32_0 : i32, i32
  }
  func.func @transform_2(%arg0: i32) -> (i32, i32) {
    %c0_i32 = arith.constant 0 : i32
    %c0_i32_0 = arith.constant 0 : i32
    %c0_i32_1 = arith.constant 0 : i32
    return %c0_i32, %c0_i32_0 : i32, i32
  }
  func.func @transform_3(%arg0: i32) -> (i32, i32) {
    %c0_i32 = arith.constant 0 : i32
    %c0_i32_0 = arith.constant 0 : i32
    %c0_i32_1 = arith.constant 0 : i32
    return %c0_i32, %c0_i32_0 : i32, i32
  }
  func.func @transform_4(%arg0: i32) -> (i32, i32) {
    %c0_i32 = arith.constant 0 : i32
    %c0_i32_0 = arith.constant 0 : i32
    %c0_i32_1 = arith.constant 0 : i32
    return %c0_i32, %c0_i32_0 : i32, i32
  }
  func.func @transform_5(%arg0: i32) -> (i32, i32) {
    %c0_i32 = arith.constant 0 : i32
    %c0_i32_0 = arith.constant 0 : i32
    %c0_i32_1 = arith.constant 0 : i32
    return %c0_i32, %c0_i32_0 : i32, i32
  }
  func.func @transform_6(%arg0: i32) -> (i32, i32) {
    %c0_i32 = arith.constant 0 : i32
    %c0_i32_0 = arith.constant 0 : i32
    %c0_i32_1 = arith.constant 0 : i32
    return %c0_i32, %c0_i32_0 : i32, i32
  }
  func.func @transform_7(%arg0: i32) -> (i32, i32) {
    %c0_i32 = arith.constant 0 : i32
    %c0_i32_0 = arith.constant 0 : i32
    return %arg0, %c0_i32 : i32, i32
  }
}

</mosaic_0001>

<llo_original>
// kernel: eegnet_forward.1
$region0: #{eegnet_forward.1}
  #allocation0 [shape = 'u32[]', space=smem, size = 0x4, offset = 0x4, fixed_abs, tag = 'smem constant byte address 0x4 - core index']
  #allocation1 [shape = 'u32[144,128]{1,0:T(1,128)}', space=vmem, size = 0x12000, scoped, tag = 'internal scratch']
  %s0 = inlined_call_operand.vmem [shape: bf16[16,384], index: 0, kind: input, shape index: {}]
  %s1 = inlined_call_operand.hbm [shape: bf16[384,1024], index: 1, kind: input, shape index: {}]
  %s2 = inlined_call_operand.vmem [shape: f32[1,1024], index: 2, kind: input, shape index: {}]
  %s3 = inlined_call_operand.hbm [shape: bf16[1024,256], index: 3, kind: input, shape index: {}]
  %s4 = inlined_call_operand.vmem [shape: f32[1,256], index: 4, kind: input, shape index: {}]
  %s5 = inlined_call_operand.hbm [shape: bf16[256,128], index: 5, kind: input, shape index: {}]
  %s6 = inlined_call_operand.vmem [shape: f32[1,128], index: 6, kind: input, shape index: {}]
  %s7 = inlined_call_operand.vmem [shape: f32[16,128], index: 7, kind: output, shape index: {}]
  %s8 = sld [smem:[#allocation0]]
  $region50: #{eegnet_forward.1} parent=0
    _
  %s10 = ssub.s32 1, %s8
  %s11 = scalar_select 0, %s10, %s8
  $region1: #{eegnet_forward.1} parent=0
    #allocation2 [shape = 'u8[786432]{0}', space=vmem, size = 0xc0000, scoped, tag = 'input window, operand 1, single buffered']
    #allocation3 [shape = 's32[1]{0}', space=sflag, size = 0x4, scoped, tag = 'scoped memory for eegnet_forward.1']
    #allocation4 [shape = 'u8[524288]{0}', space=vmem, size = 0x80000, scoped, tag = 'input window, operand 3, single buffered']
    #allocation5 [shape = 's32[1]{0}', space=sflag, size = 0x4, scoped, tag = 'scoped memory for eegnet_forward.1']
    #allocation6 [shape = 'u8[65536]{0}', space=vmem, size = 0x10000, scoped, tag = 'input window, operand 5, single buffered']
    %12 = vsyncpa [#allocation3], 0
    %13 = vsyncpa [#allocation5], 0
    // Predicated region
    $region2: #{eegnet_forward.1} parent=1 // pred_check
      _
    $region3: #{eegnet_forward.1} parent=1 // pred_check_branch
      %15 = sbr.rel (0) target = $region5
    $region4: #{eegnet_forward.1} parent=1 // pred_region
      _
    $region5: #{eegnet_forward.1} parent=1 // pred_fallthru
      _
    // Predicated region
    $region6: #{eegnet_forward.1} parent=1 // pred_check
      _
    $region7: #{eegnet_forward.1} parent=1 // pred_check_branch
      %17 = sbr.rel (0) target = $region9
    $region8: #{eegnet_forward.1} parent=1 // pred_region
      %s19 = ssub.s32 24576, 24576
      %20 = vsyncadd [#allocation3], %s19
      %s21 = sshll.u32 [#allocation2], 4
      %s22 = int_to_ptr.vmem [resolvable:$true] %s21
      %27 = dma.hbm_to_vmem [thread:$0]  %s1, 24576, %s22, [#allocation3], 512, 512, 32
    $region9: #{eegnet_forward.1} parent=1 // pred_fallthru
      _
    // Predicated region
    $region10: #{eegnet_forward.1} parent=1 // pred_check
      _
    $region11: #{eegnet_forward.1} parent=1 // pred_check_branch
      %29 = sbr.rel (0) target = $region13
    $region12: #{eegnet_forward.1} parent=1 // pred_region
      _
    $region13: #{eegnet_forward.1} parent=1 // pred_fallthru
      _
    // Predicated region
    $region14: #{eegnet_forward.1} parent=1 // pred_check
      _
    $region15: #{eegnet_forward.1} parent=1 // pred_check_branch
      %31 = sbr.rel (0) target = $region17
    $region16: #{eegnet_forward.1} parent=1 // pred_region
      %s33 = ssub.s32 16384, 16384
      %34 = vsyncadd [#allocation5], %s33
      %s35 = sshll.u32 [#allocation4], 4
      %s36 = int_to_ptr.vmem [resolvable:$true] %s35
      %41 = dma.hbm_to_vmem [thread:$0]  %s3, 16384, %s36, [#allocation5], 128, 128, 8
    $region17: #{eegnet_forward.1} parent=1 // pred_fallthru
      _
    // Predicated region
    $region18: #{eegnet_forward.1} parent=1 // pred_check
      _
    $region19: #{eegnet_forward.1} parent=1 // pred_check_branch
      %43 = sbr.rel (0) target = $region21
    $region20: #{eegnet_forward.1} parent=1 // pred_region
      _
    $region21: #{eegnet_forward.1} parent=1 // pred_fallthru
      _
    // Predicated region
    $region22: #{eegnet_forward.1} parent=1 // pred_check
      _
    $region23: #{eegnet_forward.1} parent=1 // pred_check_branch
      %45 = sbr.rel (0) target = $region25
    $region24: #{eegnet_forward.1} parent=1 // pred_region
      %s47 = ssub.s32 2048, 2048
      %48 = vsyncadd [#allocation5], %s47
      %s49 = sshll.u32 [#allocation6], 4
      %s50 = int_to_ptr.vmem [resolvable:$true] %s49
      %55 = dma.hbm_to_vmem [thread:$0]  %s5, 2048, %s50, [#allocation5], 64, 64, 4
    $region25: #{eegnet_forward.1} parent=1 // pred_fallthru
      _
    // Predicated region
    $region26: #{eegnet_forward.1} parent=1 // pred_check
      _
    $region27: #{eegnet_forward.1} parent=1 // pred_check_branch
      %57 = sbr.rel (0) target = $region29
    $region28: #{eegnet_forward.1} parent=1 // pred_region
      _
    $region29: #{eegnet_forward.1} parent=1 // pred_fallthru
      _
    // Predicated region
    $region30: #{eegnet_forward.1} parent=1 // pred_check
      _
    $region31: #{eegnet_forward.1} parent=1 // pred_check_branch
      %59 = sbr.rel (0) target = $region33
    $region32: #{eegnet_forward.1} parent=1 // pred_region
      %60 = dma.done [#allocation3], 24576
    $region33: #{eegnet_forward.1} parent=1 // pred_fallthru
      _
    // Predicated region
    $region34: #{eegnet_forward.1} parent=1 // pred_check
      _
    $region35: #{eegnet_forward.1} parent=1 // pred_check_branch
      %62 = sbr.rel (0) target = $region37
    $region36: #{eegnet_forward.1} parent=1 // pred_region
      %63 = dma.done [#allocation5], 16384
    $region37: #{eegnet_forward.1} parent=1 // pred_fallthru
      _
    // Predicated region
    $region38: #{eegnet_forward.1} parent=1 // pred_check
      _
    $region39: #{eegnet_forward.1} parent=1 // pred_check_branch
      %65 = sbr.rel (0) target = $region41
    $region40: #{eegnet_forward.1} parent=1 // pred_region
      %66 = dma.done [#allocation5], 2048
    $region41: #{eegnet_forward.1} parent=1 // pred_fallthru
      _
    %v68 = vld [vmem:[%s0] sm:$0xff]
    %v69 = vld [vmem:[%s0 + $0x8] sm:$0xf]
    %v70 = vld [vmem:[%s0 + $0xc] sm:$0xff]
    %v71 = vld [vmem:[%s0 + $0x14] sm:$0xf]
    %v72 = vld [vmem:[#allocation2] sm:$0xff]
    %v73 = vld [vmem:[#allocation2 + $0x8] sm:$0xff]
    %v74 = vld [vmem:[#allocation2 + $0x10] sm:$0xff]
    %v75 = vld [vmem:[#allocation2 + $0x18] sm:$0xff]
    %v76 = vld [vmem:[#allocation2 + $0x20] sm:$0xff]
    %v77 = vld [vmem:[#allocation2 + $0x28] sm:$0xff]
    %v78 = vld [vmem:[#allocation2 + $0x30] sm:$0xff]
    %v79 = vld [vmem:[#allocation2 + $0x38] sm:$0xff]
    %v80 = vld [vmem:[#allocation2 + $0x40] sm:$0xff]
    %v81 = vld [vmem:[#allocation2 + $0x48] sm:$0xff]
    %v82 = vld [vmem:[#allocation2 + $0x50] sm:$0xff]
    %v83 = vld [vmem:[#allocation2 + $0x58] sm:$0xff]
    %v84 = vld [vmem:[#allocation2 + $0x60] sm:$0xff]
    %v85 = vld [vmem:[#allocation2 + $0x68] sm:$0xff]
    %v86 = vld [vmem:[#allocation2 + $0x70] sm:$0xff]
    %v87 = vld [vmem:[#allocation2 + $0x78] sm:$0xff]
    %v88 = vld [vmem:[#allocation2 + $0x80] sm:$0xff]
    %v89 = vld [vmem:[#allocation2 + $0x88] sm:$0xff]
    %v90 = vld [vmem:[#allocation2 + $0x90] sm:$0xff]
    %v91 = vld [vmem:[#allocation2 + $0x98] sm:$0xff]
    %v92 = vld [vmem:[#allocation2 + $0xa0] sm:$0xff]
    %v93 = vld [vmem:[#allocation2 + $0xa8] sm:$0xff]
    %v94 = vld [vmem:[#allocation2 + $0xb0] sm:$0xff]
    %v95 = vld [vmem:[#allocation2 + $0xb8] sm:$0xff]
    %v96 = vld [vmem:[#allocation2 + $0xc0] sm:$0xff]
    %v97 = vld [vmem:[#allocation2 + $0xc8] sm:$0xff]
    %v98 = vld [vmem:[#allocation2 + $0xd0] sm:$0xff]
    %v99 = vld [vmem:[#allocation2 + $0xd8] sm:$0xff]
    %v100 = vld [vmem:[#allocation2 + $0xe0] sm:$0xff]
    %v101 = vld [vmem:[#allocation2 + $0xe8] sm:$0xff]
    %v102 = vld [vmem:[#allocation2 + $0xf0] sm:$0xff]
    %v103 = vld [vmem:[#allocation2 + $0xf8] sm:$0xff]
    %v104 = vld [vmem:[#allocation2 + $0x100] sm:$0xff]
    %v105 = vld [vmem:[#allocation2 + $0x108] sm:$0xff]
    %v106 = vld [vmem:[#allocation2 + $0x110] sm:$0xff]
    %v107 = vld [vmem:[#allocation2 + $0x118] sm:$0xff]
    %v108 = vld [vmem:[#allocation2 + $0x120] sm:$0xff]
    %v109 = vld [vmem:[#allocation2 + $0x128] sm:$0xff]
    %v110 = vld [vmem:[#allocation2 + $0x130] sm:$0xff]
    %v111 = vld [vmem:[#allocation2 + $0x138] sm:$0xff]
    %v112 = vld [vmem:[#allocation2 + $0x140] sm:$0xff]
    %v113 = vld [vmem:[#allocation2 + $0x148] sm:$0xff]
    %v114 = vld [vmem:[#allocation2 + $0x150] sm:$0xff]
    %v115 = vld [vmem:[#allocation2 + $0x158] sm:$0xff]
    %v116 = vld [vmem:[#allocation2 + $0x160] sm:$0xff]
    %v117 = vld [vmem:[#allocation2 + $0x168] sm:$0xff]
    %v118 = vld [vmem:[#allocation2 + $0x170] sm:$0xff]
    %v119 = vld [vmem:[#allocation2 + $0x178] sm:$0xff]
    %v120 = vld [vmem:[#allocation2 + $0x180] sm:$0xff]
    %v121 = vld [vmem:[#allocation2 + $0x188] sm:$0xff]
    %v122 = vld [vmem:[#allocation2 + $0x190] sm:$0xff]
    %v123 = vld [vmem:[#allocation2 + $0x198] sm:$0xff]
    %v124 = vld [vmem:[#allocation2 + $0x1a0] sm:$0xff]
    %v125 = vld [vmem:[#allocation2 + $0x1a8] sm:$0xff]
    %v126 = vld [vmem:[#allocation2 + $0x1b0] sm:$0xff]
    %v127 = vld [vmem:[#allocation2 + $0x1b8] sm:$0xff]
    %v128 = vld [vmem:[#allocation2 + $0x1c0] sm:$0xff]
    %v129 = vld [vmem:[#allocation2 + $0x1c8] sm:$0xff]
    %v130 = vld [vmem:[#allocation2 + $0x1d0] sm:$0xff]
    %v131 = vld [vmem:[#allocation2 + $0x1d8] sm:$0xff]
    %v132 = vld [vmem:[#allocation2 + $0x1e0] sm:$0xff]
    %v133 = vld [vmem:[#allocation2 + $0x1e8] sm:$0xff]
    %v134 = vld [vmem:[#allocation2 + $0x1f0] sm:$0xff]
    %v135 = vld [vmem:[#allocation2 + $0x1f8] sm:$0xff]
    %v136 = vld [vmem:[#allocation2 + $0x200] sm:$0xff]
    %v137 = vld [vmem:[#allocation2 + $0x208] sm:$0xff]
    %v138 = vld [vmem:[#allocation2 + $0x210] sm:$0xff]
    %v139 = vld [vmem:[#allocation2 + $0x218] sm:$0xff]
    %v140 = vld [vmem:[#allocation2 + $0x220] sm:$0xff]
    %v141 = vld [vmem:[#allocation2 + $0x228] sm:$0xff]
    %v142 = vld [vmem:[#allocation2 + $0x230] sm:$0xff]
    %v143 = vld [vmem:[#allocation2 + $0x238] sm:$0xff]
    %v144 = vld [vmem:[#allocation2 + $0x240] sm:$0xff]
    %v145 = vld [vmem:[#allocation2 + $0x248] sm:$0xff]
    %v146 = vld [vmem:[#allocation2 + $0x250] sm:$0xff]
    %v147 = vld [vmem:[#allocation2 + $0x258] sm:$0xff]
    %v148 = vld [vmem:[#allocation2 + $0x260] sm:$0xff]
    %v149 = vld [vmem:[#allocation2 + $0x268] sm:$0xff]
    %v150 = vld [vmem:[#allocation2 + $0x270] sm:$0xff]
    %v151 = vld [vmem:[#allocation2 + $0x278] sm:$0xff]
    %v152 = vld [vmem:[#allocation2 + $0x280] sm:$0xff]
    %v153 = vld [vmem:[#allocation2 + $0x288] sm:$0xff]
    %v154 = vld [vmem:[#allocation2 + $0x290] sm:$0xff]
    %v155 = vld [vmem:[#allocation2 + $0x298] sm:$0xff]
    %v156 = vld [vmem:[#allocation2 + $0x2a0] sm:$0xff]
    %v157 = vld [vmem:[#allocation2 + $0x2a8] sm:$0xff]
    %v158 = vld [vmem:[#allocation2 + $0x2b0] sm:$0xff]
    %v159 = vld [vmem:[#allocation2 + $0x2b8] sm:$0xff]
    %v160 = vld [vmem:[#allocation2 + $0x2c0] sm:$0xff]
    %v161 = vld [vmem:[#allocation2 + $0x2c8] sm:$0xff]
    %v162 = vld [vmem:[#allocation2 + $0x2d0] sm:$0xff]
    %v163 = vld [vmem:[#allocation2 + $0x2d8] sm:$0xff]
    %v164 = vld [vmem:[#allocation2 + $0x2e0] sm:$0xff]
    %v165 = vld [vmem:[#allocation2 + $0x2e8] sm:$0xff]
    %v166 = vld [vmem:[#allocation2 + $0x2f0] sm:$0xff]
    %v167 = vld [vmem:[#allocation2 + $0x2f8] sm:$0xff]
    %v168 = vld [vmem:[#allocation2 + $0x300] sm:$0xff]
    %v169 = vld [vmem:[#allocation2 + $0x308] sm:$0xff]
    %v170 = vld [vmem:[#allocation2 + $0x310] sm:$0xff]
    %v171 = vld [vmem:[#allocation2 + $0x318] sm:$0xff]
    %v172 = vld [vmem:[#allocation2 + $0x320] sm:$0xff]
    %v173 = vld [vmem:[#allocation2 + $0x328] sm:$0xff]
    %v174 = vld [vmem:[#allocation2 + $0x330] sm:$0xff]
    %v175 = vld [vmem:[#allocation2 + $0x338] sm:$0xff]
    %v176 = vld [vmem:[#allocation2 + $0x340] sm:$0xff]
    %v177 = vld [vmem:[#allocation2 + $0x348] sm:$0xff]
    %v178 = vld [vmem:[#allocation2 + $0x350] sm:$0xff]
    %v179 = vld [vmem:[#allocation2 + $0x358] sm:$0xff]
    %v180 = vld [vmem:[#allocation2 + $0x360] sm:$0xff]
    %v181 = vld [vmem:[#allocation2 + $0x368] sm:$0xff]
    %v182 = vld [vmem:[#allocation2 + $0x370] sm:$0xff]
    %v183 = vld [vmem:[#allocation2 + $0x378] sm:$0xff]
    %v184 = vld [vmem:[#allocation2 + $0x380] sm:$0xff]
    %v185 = vld [vmem:[#allocation2 + $0x388] sm:$0xff]
    %v186 = vld [vmem:[#allocation2 + $0x390] sm:$0xff]
    %v187 = vld [vmem:[#allocation2 + $0x398] sm:$0xff]
    %v188 = vld [vmem:[#allocation2 + $0x3a0] sm:$0xff]
    %v189 = vld [vmem:[#allocation2 + $0x3a8] sm:$0xff]
    %v190 = vld [vmem:[#allocation2 + $0x3b0] sm:$0xff]
    %v191 = vld [vmem:[#allocation2 + $0x3b8] sm:$0xff]
    %v192 = vld [vmem:[#allocation2 + $0x3c0] sm:$0xff]
    %v193 = vld [vmem:[#allocation2 + $0x3c8] sm:$0xff]
    %v194 = vld [vmem:[#allocation2 + $0x3d0] sm:$0xff]
    %v195 = vld [vmem:[#allocation2 + $0x3d8] sm:$0xff]
    %v196 = vld [vmem:[#allocation2 + $0x3e0] sm:$0xff]
    %v197 = vld [vmem:[#allocation2 + $0x3e8] sm:$0xff]
    %v198 = vld [vmem:[#allocation2 + $0x3f0] sm:$0xff]
    %v199 = vld [vmem:[#allocation2 + $0x3f8] sm:$0xff]
    %v200 = vld [vmem:[#allocation2 + $0x400] sm:$0xff]
    %v201 = vld [vmem:[#allocation2 + $0x408] sm:$0xff]
    %v202 = vld [vmem:[#allocation2 + $0x410] sm:$0xff]
    %v203 = vld [vmem:[#allocation2 + $0x418] sm:$0xff]
    %v204 = vld [vmem:[#allocation2 + $0x420] sm:$0xff]
    %v205 = vld [vmem:[#allocation2 + $0x428] sm:$0xff]
    %v206 = vld [vmem:[#allocation2 + $0x430] sm:$0xff]
    %v207 = vld [vmem:[#allocation2 + $0x438] sm:$0xff]
    %v208 = vld [vmem:[#allocation2 + $0x440] sm:$0xff]
    %v209 = vld [vmem:[#allocation2 + $0x448] sm:$0xff]
    %v210 = vld [vmem:[#allocation2 + $0x450] sm:$0xff]
    %v211 = vld [vmem:[#allocation2 + $0x458] sm:$0xff]
    %v212 = vld [vmem:[#allocation2 + $0x460] sm:$0xff]
    %v213 = vld [vmem:[#allocation2 + $0x468] sm:$0xff]
    %v214 = vld [vmem:[#allocation2 + $0x470] sm:$0xff]
    %v215 = vld [vmem:[#allocation2 + $0x478] sm:$0xff]
    %v216 = vld [vmem:[#allocation2 + $0x480] sm:$0xff]
    %v217 = vld [vmem:[#allocation2 + $0x488] sm:$0xff]
    %v218 = vld [vmem:[#allocation2 + $0x490] sm:$0xff]
    %v219 = vld [vmem:[#allocation2 + $0x498] sm:$0xff]
    %v220 = vld [vmem:[#allocation2 + $0x4a0] sm:$0xff]
    %v221 = vld [vmem:[#allocation2 + $0x4a8] sm:$0xff]
    %v222 = vld [vmem:[#allocation2 + $0x4b0] sm:$0xff]
    %v223 = vld [vmem:[#allocation2 + $0x4b8] sm:$0xff]
    %v224 = vld [vmem:[#allocation2 + $0x4c0] sm:$0xff]
    %v225 = vld [vmem:[#allocation2 + $0x4c8] sm:$0xff]
    %v226 = vld [vmem:[#allocation2 + $0x4d0] sm:$0xff]
    %v227 = vld [vmem:[#allocation2 + $0x4d8] sm:$0xff]
    %v228 = vld [vmem:[#allocation2 + $0x4e0] sm:$0xff]
    %v229 = vld [vmem:[#allocation2 + $0x4e8] sm:$0xff]
    %v230 = vld [vmem:[#allocation2 + $0x4f0] sm:$0xff]
    %v231 = vld [vmem:[#allocation2 + $0x4f8] sm:$0xff]
    %v232 = vld [vmem:[#allocation2 + $0x500] sm:$0xff]
    %v233 = vld [vmem:[#allocation2 + $0x508] sm:$0xff]
    %v234 = vld [vmem:[#allocation2 + $0x510] sm:$0xff]
    %v235 = vld [vmem:[#allocation2 + $0x518] sm:$0xff]
    %v236 = vld [vmem:[#allocation2 + $0x520] sm:$0xff]
    %v237 = vld [vmem:[#allocation2 + $0x528] sm:$0xff]
    %v238 = vld [vmem:[#allocation2 + $0x530] sm:$0xff]
    %v239 = vld [vmem:[#allocation2 + $0x538] sm:$0xff]
    %v240 = vld [vmem:[#allocation2 + $0x540] sm:$0xff]
    %v241 = vld [vmem:[#allocation2 + $0x548] sm:$0xff]
    %v242 = vld [vmem:[#allocation2 + $0x550] sm:$0xff]
    %v243 = vld [vmem:[#allocation2 + $0x558] sm:$0xff]
    %v244 = vld [vmem:[#allocation2 + $0x560] sm:$0xff]
    %v245 = vld [vmem:[#allocation2 + $0x568] sm:$0xff]
    %v246 = vld [vmem:[#allocation2 + $0x570] sm:$0xff]
    %v247 = vld [vmem:[#allocation2 + $0x578] sm:$0xff]
    %v248 = vld [vmem:[#allocation2 + $0x580] sm:$0xff]
    %v249 = vld [vmem:[#allocation2 + $0x588] sm:$0xff]
    %v250 = vld [vmem:[#allocation2 + $0x590] sm:$0xff]
    %v251 = vld [vmem:[#allocation2 + $0x598] sm:$0xff]
    %v252 = vld [vmem:[#allocation2 + $0x5a0] sm:$0xff]
    %v253 = vld [vmem:[#allocation2 + $0x5a8] sm:$0xff]
    %v254 = vld [vmem:[#allocation2 + $0x5b0] sm:$0xff]
    %v255 = vld [vmem:[#allocation2 + $0x5b8] sm:$0xff]
    %v256 = vld [vmem:[#allocation2 + $0x5c0] sm:$0xff]
    %v257 = vld [vmem:[#allocation2 + $0x5c8] sm:$0xff]
    %v258 = vld [vmem:[#allocation2 + $0x5d0] sm:$0xff]
    %v259 = vld [vmem:[#allocation2 + $0x5d8] sm:$0xff]
    %v260 = vld [vmem:[#allocation2 + $0x5e0] sm:$0xff]
    %v261 = vld [vmem:[#allocation2 + $0x5e8] sm:$0xff]
    %v262 = vld [vmem:[#allocation2 + $0x5f0] sm:$0xff]
    %v263 = vld [vmem:[#allocation2 + $0x5f8] sm:$0xff]
    %v264 = vld [vmem:[%s2] sm:$0xff]
    %v266 = vlaneseq
    %v267 = vshrl.u32 %v266, 7
    %v268 = vsub.s32 0, %v267
    %v269 = vrot.slane %v264, %v268
    %v270 = vlaneseq
    %v271 = vshrl.u32 %v270, 7
    %v272 = vsub.s32 1, %v271
    %v273 = vrot.slane %v264, %v272
    %v274 = vlaneseq
    %v275 = vshrl.u32 %v274, 7
    %v276 = vsub.s32 2, %v275
    %v277 = vrot.slane %v264, %v276
    %v278 = vlaneseq
    %v279 = vshrl.u32 %v278, 7
    %v280 = vsub.s32 3, %v279
    %v281 = vrot.slane %v264, %v280
    %v282 = vlaneseq
    %v283 = vshrl.u32 %v282, 7
    %v284 = vsub.s32 4, %v283
    %v285 = vrot.slane %v264, %v284
    %v286 = vlaneseq
    %v287 = vshrl.u32 %v286, 7
    %v288 = vsub.s32 5, %v287
    %v289 = vrot.slane %v264, %v288
    %v290 = vlaneseq
    %v291 = vshrl.u32 %v290, 7
    %v292 = vsub.s32 6, %v291
    %v293 = vrot.slane %v264, %v292
    %v294 = vlaneseq
    %v295 = vshrl.u32 %v294, 7
    %v296 = vsub.s32 7, %v295
    %v297 = vrot.slane %v264, %v296
    %v310 = vunpack.c.l.b16 %v68
    %v311 = vunpack.c.h.b16 %v68
    %v312 = vunpack.c.l.b16 %v69
    %v313 = vunpack.c.l.b16 %v70
    %v314 = vunpack.c.h.b16 %v70
    %v315 = vunpack.c.l.b16 %v71
    %v316 = vpack.c.b16 %v313, %v310
    %v317 = vpack.c.b16 %v314, %v311
    %v318 = vpack.c.b16 %v315, %v312
    %v514 = vunpack.c.l.b16 %v72
    %v515 = vunpack.c.h.b16 %v72
    %v516 = vunpack.c.l.b16 %v73
    %v517 = vunpack.c.h.b16 %v73
    %v518 = vunpack.c.l.b16 %v74
    %v519 = vunpack.c.h.b16 %v74
    %v520 = vunpack.c.l.b16 %v75
    %v521 = vunpack.c.h.b16 %v75
    %v522 = vunpack.c.l.b16 %v76
    %v523 = vunpack.c.h.b16 %v76
    %v524 = vunpack.c.l.b16 %v77
    %v525 = vunpack.c.h.b16 %v77
    %v526 = vunpack.c.l.b16 %v78
    %v527 = vunpack.c.h.b16 %v78
    %v528 = vunpack.c.l.b16 %v79
    %v529 = vunpack.c.h.b16 %v79
    %v530 = vunpack.c.l.b16 %v80
    %v531 = vunpack.c.h.b16 %v80
    %v532 = vunpack.c.l.b16 %v81
    %v533 = vunpack.c.h.b16 %v81
    %v534 = vunpack.c.l.b16 %v82
    %v535 = vunpack.c.h.b16 %v82
    %v536 = vunpack.c.l.b16 %v83
    %v537 = vunpack.c.h.b16 %v83
    %v538 = vunpack.c.l.b16 %v84
    %v539 = vunpack.c.h.b16 %v84
    %v540 = vunpack.c.l.b16 %v85
    %v541 = vunpack.c.h.b16 %v85
    %v542 = vunpack.c.l.b16 %v86
    %v543 = vunpack.c.h.b16 %v86
    %v544 = vunpack.c.l.b16 %v87
    %v545 = vunpack.c.h.b16 %v87
    %v546 = vunpack.c.l.b16 %v88
    %v547 = vunpack.c.h.b16 %v88
    %v548 = vunpack.c.l.b16 %v89
    %v549 = vunpack.c.h.b16 %v89
    %v550 = vunpack.c.l.b16 %v90
    %v551 = vunpack.c.h.b16 %v90
    %v552 = vunpack.c.l.b16 %v91
    %v553 = vunpack.c.h.b16 %v91
    %v554 = vunpack.c.l.b16 %v92
    %v555 = vunpack.c.h.b16 %v92
    %v556 = vunpack.c.l.b16 %v93
    %v557 = vunpack.c.h.b16 %v93
    %v558 = vunpack.c.l.b16 %v94
    %v559 = vunpack.c.h.b16 %v94
    %v560 = vunpack.c.l.b16 %v95
    %v561 = vunpack.c.h.b16 %v95
    %v562 = vunpack.c.l.b16 %v96
    %v563 = vunpack.c.h.b16 %v96
    %v564 = vunpack.c.l.b16 %v97
    %v565 = vunpack.c.h.b16 %v97
    %v566 = vunpack.c.l.b16 %v98
    %v567 = vunpack.c.h.b16 %v98
    %v568 = vunpack.c.l.b16 %v99
    %v569 = vunpack.c.h.b16 %v99
    %v570 = vunpack.c.l.b16 %v100
    %v571 = vunpack.c.h.b16 %v100
    %v572 = vunpack.c.l.b16 %v101
    %v573 = vunpack.c.h.b16 %v101
    %v574 = vunpack.c.l.b16 %v102
    %v575 = vunpack.c.h.b16 %v102
    %v576 = vunpack.c.l.b16 %v103
    %v577 = vunpack.c.h.b16 %v103
    %v578 = vunpack.c.l.b16 %v104
    %v579 = vunpack.c.h.b16 %v104
    %v580 = vunpack.c.l.b16 %v105
    %v581 = vunpack.c.h.b16 %v105
    %v582 = vunpack.c.l.b16 %v106
    %v583 = vunpack.c.h.b16 %v106
    %v584 = vunpack.c.l.b16 %v107
    %v585 = vunpack.c.h.b16 %v107
    %v586 = vunpack.c.l.b16 %v108
    %v587 = vunpack.c.h.b16 %v108
    %v588 = vunpack.c.l.b16 %v109
    %v589 = vunpack.c.h.b16 %v109
    %v590 = vunpack.c.l.b16 %v110
    %v591 = vunpack.c.h.b16 %v110
    %v592 = vunpack.c.l.b16 %v111
    %v593 = vunpack.c.h.b16 %v111
    %v594 = vunpack.c.l.b16 %v112
    %v595 = vunpack.c.h.b16 %v112
    %v596 = vunpack.c.l.b16 %v113
    %v597 = vunpack.c.h.b16 %v113
    %v598 = vunpack.c.l.b16 %v114
    %v599 = vunpack.c.h.b16 %v114
    %v600 = vunpack.c.l.b16 %v115
    %v601 = vunpack.c.h.b16 %v115
    %v602 = vunpack.c.l.b16 %v116
    %v603 = vunpack.c.h.b16 %v116
    %v604 = vunpack.c.l.b16 %v117
    %v605 = vunpack.c.h.b16 %v117
    %v606 = vunpack.c.l.b16 %v118
    %v607 = vunpack.c.h.b16 %v118
    %v608 = vunpack.c.l.b16 %v119
    %v609 = vunpack.c.h.b16 %v119
    %v610 = vunpack.c.l.b16 %v120
    %v611 = vunpack.c.h.b16 %v120
    %v612 = vunpack.c.l.b16 %v121
    %v613 = vunpack.c.h.b16 %v121
    %v614 = vunpack.c.l.b16 %v122
    %v615 = vunpack.c.h.b16 %v122
    %v616 = vunpack.c.l.b16 %v123
    %v617 = vunpack.c.h.b16 %v123
    %v618 = vunpack.c.l.b16 %v124
    %v619 = vunpack.c.h.b16 %v124
    %v620 = vunpack.c.l.b16 %v125
    %v621 = vunpack.c.h.b16 %v125
    %v622 = vunpack.c.l.b16 %v126
    %v623 = vunpack.c.h.b16 %v126
    %v624 = vunpack.c.l.b16 %v127
    %v625 = vunpack.c.h.b16 %v127
    %v626 = vunpack.c.l.b16 %v128
    %v627 = vunpack.c.h.b16 %v128
    %v628 = vunpack.c.l.b16 %v129
    %v629 = vunpack.c.h.b16 %v129
    %v630 = vunpack.c.l.b16 %v130
    %v631 = vunpack.c.h.b16 %v130
    %v632 = vunpack.c.l.b16 %v131
    %v633 = vunpack.c.h.b16 %v131
    %v634 = vunpack.c.l.b16 %v132
    %v635 = vunpack.c.h.b16 %v132
    %v636 = vunpack.c.l.b16 %v133
    %v637 = vunpack.c.h.b16 %v133
    %v638 = vunpack.c.l.b16 %v134
    %v639 = vunpack.c.h.b16 %v134
    %v640 = vunpack.c.l.b16 %v135
    %v641 = vunpack.c.h.b16 %v135
    %v642 = vunpack.c.l.b16 %v136
    %v643 = vunpack.c.h.b16 %v136
    %v644 = vunpack.c.l.b16 %v137
    %v645 = vunpack.c.h.b16 %v137
    %v646 = vunpack.c.l.b16 %v138
    %v647 = vunpack.c.h.b16 %v138
    %v648 = vunpack.c.l.b16 %v139
    %v649 = vunpack.c.h.b16 %v139
    %v650 = vunpack.c.l.b16 %v140
    %v651 = vunpack.c.h.b16 %v140
    %v652 = vunpack.c.l.b16 %v141
    %v653 = vunpack.c.h.b16 %v141
    %v654 = vunpack.c.l.b16 %v142
    %v655 = vunpack.c.h.b16 %v142
    %v656 = vunpack.c.l.b16 %v143
    %v657 = vunpack.c.h.b16 %v143
    %v658 = vunpack.c.l.b16 %v144
    %v659 = vunpack.c.h.b16 %v144
    %v660 = vunpack.c.l.b16 %v145
    %v661 = vunpack.c.h.b16 %v145
    %v662 = vunpack.c.l.b16 %v146
    %v663 = vunpack.c.h.b16 %v146
    %v664 = vunpack.c.l.b16 %v147
    %v665 = vunpack.c.h.b16 %v147
    %v666 = vunpack.c.l.b16 %v148
    %v667 = vunpack.c.h.b16 %v148
    %v668 = vunpack.c.l.b16 %v149
    %v669 = vunpack.c.h.b16 %v149
    %v670 = vunpack.c.l.b16 %v150
    %v671 = vunpack.c.h.b16 %v150
    %v672 = vunpack.c.l.b16 %v151
    %v673 = vunpack.c.h.b16 %v151
    %v674 = vunpack.c.l.b16 %v152
    %v675 = vunpack.c.h.b16 %v152
    %v676 = vunpack.c.l.b16 %v153
    %v677 = vunpack.c.h.b16 %v153
    %v678 = vunpack.c.l.b16 %v154
    %v679 = vunpack.c.h.b16 %v154
    %v680 = vunpack.c.l.b16 %v155
    %v681 = vunpack.c.h.b16 %v155
    %v682 = vunpack.c.l.b16 %v156
    %v683 = vunpack.c.h.b16 %v156
    %v684 = vunpack.c.l.b16 %v157
    %v685 = vunpack.c.h.b16 %v157
    %v686 = vunpack.c.l.b16 %v158
    %v687 = vunpack.c.h.b16 %v158
    %v688 = vunpack.c.l.b16 %v159
    %v689 = vunpack.c.h.b16 %v159
    %v690 = vunpack.c.l.b16 %v160
    %v691 = vunpack.c.h.b16 %v160
    %v692 = vunpack.c.l.b16 %v161
    %v693 = vunpack.c.h.b16 %v161
    %v694 = vunpack.c.l.b16 %v162
    %v695 = vunpack.c.h.b16 %v162
    %v696 = vunpack.c.l.b16 %v163
    %v697 = vunpack.c.h.b16 %v163
    %v698 = vunpack.c.l.b16 %v164
    %v699 = vunpack.c.h.b16 %v164
    %v700 = vunpack.c.l.b16 %v165
    %v701 = vunpack.c.h.b16 %v165
    %v702 = vunpack.c.l.b16 %v166
    %v703 = vunpack.c.h.b16 %v166
    %v704 = vunpack.c.l.b16 %v167
    %v705 = vunpack.c.h.b16 %v167
    %v706 = vunpack.c.l.b16 %v168
    %v707 = vunpack.c.h.b16 %v168
    %v708 = vunpack.c.l.b16 %v169
    %v709 = vunpack.c.h.b16 %v169
    %v710 = vunpack.c.l.b16 %v170
    %v711 = vunpack.c.h.b16 %v170
    %v712 = vunpack.c.l.b16 %v171
    %v713 = vunpack.c.h.b16 %v171
    %v714 = vunpack.c.l.b16 %v172
    %v715 = vunpack.c.h.b16 %v172
    %v716 = vunpack.c.l.b16 %v173
    %v717 = vunpack.c.h.b16 %v173
    %v718 = vunpack.c.l.b16 %v174
    %v719 = vunpack.c.h.b16 %v174
    %v720 = vunpack.c.l.b16 %v175
    %v721 = vunpack.c.h.b16 %v175
    %v722 = vunpack.c.l.b16 %v176
    %v723 = vunpack.c.h.b16 %v176
    %v724 = vunpack.c.l.b16 %v177
    %v725 = vunpack.c.h.b16 %v177
    %v726 = vunpack.c.l.b16 %v178
    %v727 = vunpack.c.h.b16 %v178
    %v728 = vunpack.c.l.b16 %v179
    %v729 = vunpack.c.h.b16 %v179
    %v730 = vunpack.c.l.b16 %v180
    %v731 = vunpack.c.h.b16 %v180
    %v732 = vunpack.c.l.b16 %v181
    %v733 = vunpack.c.h.b16 %v181
    %v734 = vunpack.c.l.b16 %v182
    %v735 = vunpack.c.h.b16 %v182
    %v736 = vunpack.c.l.b16 %v183
    %v737 = vunpack.c.h.b16 %v183
    %v738 = vunpack.c.l.b16 %v184
    %v739 = vunpack.c.h.b16 %v184
    %v740 = vunpack.c.l.b16 %v185
    %v741 = vunpack.c.h.b16 %v185
    %v742 = vunpack.c.l.b16 %v186
    %v743 = vunpack.c.h.b16 %v186
    %v744 = vunpack.c.l.b16 %v187
    %v745 = vunpack.c.h.b16 %v187
    %v746 = vunpack.c.l.b16 %v188
    %v747 = vunpack.c.h.b16 %v188
    %v748 = vunpack.c.l.b16 %v189
    %v749 = vunpack.c.h.b16 %v189
    %v750 = vunpack.c.l.b16 %v190
    %v751 = vunpack.c.h.b16 %v190
    %v752 = vunpack.c.l.b16 %v191
    %v753 = vunpack.c.h.b16 %v191
    %v754 = vunpack.c.l.b16 %v192
    %v755 = vunpack.c.h.b16 %v192
    %v756 = vunpack.c.l.b16 %v193
    %v757 = vunpack.c.h.b16 %v193
    %v758 = vunpack.c.l.b16 %v194
    %v759 = vunpack.c.h.b16 %v194
    %v760 = vunpack.c.l.b16 %v195
    %v761 = vunpack.c.h.b16 %v195
    %v762 = vunpack.c.l.b16 %v196
    %v763 = vunpack.c.h.b16 %v196
    %v764 = vunpack.c.l.b16 %v197
    %v765 = vunpack.c.h.b16 %v197
    %v766 = vunpack.c.l.b16 %v198
    %v767 = vunpack.c.h.b16 %v198
    %v768 = vunpack.c.l.b16 %v199
    %v769 = vunpack.c.h.b16 %v199
    %v770 = vunpack.c.l.b16 %v200
    %v771 = vunpack.c.h.b16 %v200
    %v772 = vunpack.c.l.b16 %v201
    %v773 = vunpack.c.h.b16 %v201
    %v774 = vunpack.c.l.b16 %v202
    %v775 = vunpack.c.h.b16 %v202
    %v776 = vunpack.c.l.b16 %v203
    %v777 = vunpack.c.h.b16 %v203
    %v778 = vunpack.c.l.b16 %v204
    %v779 = vunpack.c.h.b16 %v204
    %v780 = vunpack.c.l.b16 %v205
    %v781 = vunpack.c.h.b16 %v205
    %v782 = vunpack.c.l.b16 %v206
    %v783 = vunpack.c.h.b16 %v206
    %v784 = vunpack.c.l.b16 %v207
    %v785 = vunpack.c.h.b16 %v207
    %v786 = vunpack.c.l.b16 %v208
    %v787 = vunpack.c.h.b16 %v208
    %v788 = vunpack.c.l.b16 %v209
    %v789 = vunpack.c.h.b16 %v209
    %v790 = vunpack.c.l.b16 %v210
    %v791 = vunpack.c.h.b16 %v210
    %v792 = vunpack.c.l.b16 %v211
    %v793 = vunpack.c.h.b16 %v211
    %v794 = vunpack.c.l.b16 %v212
    %v795 = vunpack.c.h.b16 %v212
    %v796 = vunpack.c.l.b16 %v213
    %v797 = vunpack.c.h.b16 %v213
    %v798 = vunpack.c.l.b16 %v214
    %v799 = vunpack.c.h.b16 %v214
    %v800 = vunpack.c.l.b16 %v215
    %v801 = vunpack.c.h.b16 %v215
    %v802 = vunpack.c.l.b16 %v216
    %v803 = vunpack.c.h.b16 %v216
    %v804 = vunpack.c.l.b16 %v217
    %v805 = vunpack.c.h.b16 %v217
    %v806 = vunpack.c.l.b16 %v218
    %v807 = vunpack.c.h.b16 %v218
    %v808 = vunpack.c.l.b16 %v219
    %v809 = vunpack.c.h.b16 %v219
    %v810 = vunpack.c.l.b16 %v220
    %v811 = vunpack.c.h.b16 %v220
    %v812 = vunpack.c.l.b16 %v221
    %v813 = vunpack.c.h.b16 %v221
    %v814 = vunpack.c.l.b16 %v222
    %v815 = vunpack.c.h.b16 %v222
    %v816 = vunpack.c.l.b16 %v223
    %v817 = vunpack.c.h.b16 %v223
    %v818 = vunpack.c.l.b16 %v224
    %v819 = vunpack.c.h.b16 %v224
    %v820 = vunpack.c.l.b16 %v225
    %v821 = vunpack.c.h.b16 %v225
    %v822 = vunpack.c.l.b16 %v226
    %v823 = vunpack.c.h.b16 %v226
    %v824 = vunpack.c.l.b16 %v227
    %v825 = vunpack.c.h.b16 %v227
    %v826 = vunpack.c.l.b16 %v228
    %v827 = vunpack.c.h.b16 %v228
    %v828 = vunpack.c.l.b16 %v229
    %v829 = vunpack.c.h.b16 %v229
    %v830 = vunpack.c.l.b16 %v230
    %v831 = vunpack.c.h.b16 %v230
    %v832 = vunpack.c.l.b16 %v231
    %v833 = vunpack.c.h.b16 %v231
    %v834 = vunpack.c.l.b16 %v232
    %v835 = vunpack.c.h.b16 %v232
    %v836 = vunpack.c.l.b16 %v233
    %v837 = vunpack.c.h.b16 %v233
    %v838 = vunpack.c.l.b16 %v234
    %v839 = vunpack.c.h.b16 %v234
    %v840 = vunpack.c.l.b16 %v235
    %v841 = vunpack.c.h.b16 %v235
    %v842 = vunpack.c.l.b16 %v236
    %v843 = vunpack.c.h.b16 %v236
    %v844 = vunpack.c.l.b16 %v237
    %v845 = vunpack.c.h.b16 %v237
    %v846 = vunpack.c.l.b16 %v238
    %v847 = vunpack.c.h.b16 %v238
    %v848 = vunpack.c.l.b16 %v239
    %v849 = vunpack.c.h.b16 %v239
    %v850 = vunpack.c.l.b16 %v240
    %v851 = vunpack.c.h.b16 %v240
    %v852 = vunpack.c.l.b16 %v241
    %v853 = vunpack.c.h.b16 %v241
    %v854 = vunpack.c.l.b16 %v242
    %v855 = vunpack.c.h.b16 %v242
    %v856 = vunpack.c.l.b16 %v243
    %v857 = vunpack.c.h.b16 %v243
    %v858 = vunpack.c.l.b16 %v244
    %v859 = vunpack.c.h.b16 %v244
    %v860 = vunpack.c.l.b16 %v245
    %v861 = vunpack.c.h.b16 %v245
    %v862 = vunpack.c.l.b16 %v246
    %v863 = vunpack.c.h.b16 %v246
    %v864 = vunpack.c.l.b16 %v247
    %v865 = vunpack.c.h.b16 %v247
    %v866 = vunpack.c.l.b16 %v248
    %v867 = vunpack.c.h.b16 %v248
    %v868 = vunpack.c.l.b16 %v249
    %v869 = vunpack.c.h.b16 %v249
    %v870 = vunpack.c.l.b16 %v250
    %v871 = vunpack.c.h.b16 %v250
    %v872 = vunpack.c.l.b16 %v251
    %v873 = vunpack.c.h.b16 %v251
    %v874 = vunpack.c.l.b16 %v252
    %v875 = vunpack.c.h.b16 %v252
    %v876 = vunpack.c.l.b16 %v253
    %v877 = vunpack.c.h.b16 %v253
    %v878 = vunpack.c.l.b16 %v254
    %v879 = vunpack.c.h.b16 %v254
    %v880 = vunpack.c.l.b16 %v255
    %v881 = vunpack.c.h.b16 %v255
    %v882 = vunpack.c.l.b16 %v256
    %v883 = vunpack.c.h.b16 %v256
    %v884 = vunpack.c.l.b16 %v257
    %v885 = vunpack.c.h.b16 %v257
    %v886 = vunpack.c.l.b16 %v258
    %v887 = vunpack.c.h.b16 %v258
    %v888 = vunpack.c.l.b16 %v259
    %v889 = vunpack.c.h.b16 %v259
    %v890 = vunpack.c.l.b16 %v260
    %v891 = vunpack.c.h.b16 %v260
    %v892 = vunpack.c.l.b16 %v261
    %v893 = vunpack.c.h.b16 %v261
    %v894 = vunpack.c.l.b16 %v262
    %v895 = vunpack.c.h.b16 %v262
    %v896 = vunpack.c.l.b16 %v263
    %v897 = vunpack.c.h.b16 %v263
    %v898 = vpack.c.b16 %v522, %v514
    %v899 = vpack.c.b16 %v523, %v515
    %v900 = vpack.c.b16 %v524, %v516
    %v901 = vpack.c.b16 %v525, %v517
    %v902 = vpack.c.b16 %v526, %v518
    %v903 = vpack.c.b16 %v527, %v519
    %v904 = vpack.c.b16 %v528, %v520
    %v905 = vpack.c.b16 %v529, %v521
    %v906 = vpack.c.b16 %v538, %v530
    %v907 = vpack.c.b16 %v539, %v531
    %v908 = vpack.c.b16 %v540, %v532
    %v909 = vpack.c.b16 %v541, %v533
    %v910 = vpack.c.b16 %v542, %v534
    %v911 = vpack.c.b16 %v543, %v535
    %v912 = vpack.c.b16 %v544, %v536
    %v913 = vpack.c.b16 %v545, %v537
    %v914 = vpack.c.b16 %v554, %v546
    %v915 = vpack.c.b16 %v555, %v547
    %v916 = vpack.c.b16 %v556, %v548
    %v917 = vpack.c.b16 %v557, %v549
    %v918 = vpack.c.b16 %v558, %v550
    %v919 = vpack.c.b16 %v559, %v551
    %v920 = vpack.c.b16 %v560, %v552
    %v921 = vpack.c.b16 %v561, %v553
    %v922 = vpack.c.b16 %v570, %v562
    %v923 = vpack.c.b16 %v571, %v563
    %v924 = vpack.c.b16 %v572, %v564
    %v925 = vpack.c.b16 %v573, %v565
    %v926 = vpack.c.b16 %v574, %v566
    %v927 = vpack.c.b16 %v575, %v567
    %v928 = vpack.c.b16 %v576, %v568
    %v929 = vpack.c.b16 %v577, %v569
    %v930 = vpack.c.b16 %v586, %v578
    %v931 = vpack.c.b16 %v587, %v579
    %v932 = vpack.c.b16 %v588, %v580
    %v933 = vpack.c.b16 %v589, %v581
    %v934 = vpack.c.b16 %v590, %v582
    %v935 = vpack.c.b16 %v591, %v583
    %v936 = vpack.c.b16 %v592, %v584
    %v937 = vpack.c.b16 %v593, %v585
    %v938 = vpack.c.b16 %v602, %v594
    %v939 = vpack.c.b16 %v603, %v595
    %v940 = vpack.c.b16 %v604, %v596
    %v941 = vpack.c.b16 %v605, %v597
    %v942 = vpack.c.b16 %v606, %v598
    %v943 = vpack.c.b16 %v607, %v599
    %v944 = vpack.c.b16 %v608, %v600
    %v945 = vpack.c.b16 %v609, %v601
    %v946 = vpack.c.b16 %v618, %v610
    %v947 = vpack.c.b16 %v619, %v611
    %v948 = vpack.c.b16 %v620, %v612
    %v949 = vpack.c.b16 %v621, %v613
    %v950 = vpack.c.b16 %v622, %v614
    %v951 = vpack.c.b16 %v623, %v615
    %v952 = vpack.c.b16 %v624, %v616
    %v953 = vpack.c.b16 %v625, %v617
    %v954 = vpack.c.b16 %v634, %v626
    %v955 = vpack.c.b16 %v635, %v627
    %v956 = vpack.c.b16 %v636, %v628
    %v957 = vpack.c.b16 %v637, %v629
    %v958 = vpack.c.b16 %v638, %v630
    %v959 = vpack.c.b16 %v639, %v631
    %v960 = vpack.c.b16 %v640, %v632
    %v961 = vpack.c.b16 %v641, %v633
    %v962 = vpack.c.b16 %v650, %v642
    %v963 = vpack.c.b16 %v651, %v643
    %v964 = vpack.c.b16 %v652, %v644
    %v965 = vpack.c.b16 %v653, %v645
    %v966 = vpack.c.b16 %v654, %v646
    %v967 = vpack.c.b16 %v655, %v647
    %v968 = vpack.c.b16 %v656, %v648
    %v969 = vpack.c.b16 %v657, %v649
    %v970 = vpack.c.b16 %v666, %v658
    %v971 = vpack.c.b16 %v667, %v659
    %v972 = vpack.c.b16 %v668, %v660
    %v973 = vpack.c.b16 %v669, %v661
    %v974 = vpack.c.b16 %v670, %v662
    %v975 = vpack.c.b16 %v671, %v663
    %v976 = vpack.c.b16 %v672, %v664
    %v977 = vpack.c.b16 %v673, %v665
    %v978 = vpack.c.b16 %v682, %v674
    %v979 = vpack.c.b16 %v683, %v675
    %v980 = vpack.c.b16 %v684, %v676
    %v981 = vpack.c.b16 %v685, %v677
    %v982 = vpack.c.b16 %v686, %v678
    %v983 = vpack.c.b16 %v687, %v679
    %v984 = vpack.c.b16 %v688, %v680
    %v985 = vpack.c.b16 %v689, %v681
    %v986 = vpack.c.b16 %v698, %v690
    %v987 = vpack.c.b16 %v699, %v691
    %v988 = vpack.c.b16 %v700, %v692
    %v989 = vpack.c.b16 %v701, %v693
    %v990 = vpack.c.b16 %v702, %v694
    %v991 = vpack.c.b16 %v703, %v695
    %v992 = vpack.c.b16 %v704, %v696
    %v993 = vpack.c.b16 %v705, %v697
    %v994 = vpack.c.b16 %v714, %v706
    %v995 = vpack.c.b16 %v715, %v707
    %v996 = vpack.c.b16 %v716, %v708
    %v997 = vpack.c.b16 %v717, %v709
    %v998 = vpack.c.b16 %v718, %v710
    %v999 = vpack.c.b16 %v719, %v711
    %v1000 = vpack.c.b16 %v720, %v712
    %v1001 = vpack.c.b16 %v721, %v713
    %v1002 = vpack.c.b16 %v730, %v722
    %v1003 = vpack.c.b16 %v731, %v723
    %v1004 = vpack.c.b16 %v732, %v724
    %v1005 = vpack.c.b16 %v733, %v725
    %v1006 = vpack.c.b16 %v734, %v726
    %v1007 = vpack.c.b16 %v735, %v727
    %v1008 = vpack.c.b16 %v736, %v728
    %v1009 = vpack.c.b16 %v737, %v729
    %v1010 = vpack.c.b16 %v746, %v738
    %v1011 = vpack.c.b16 %v747, %v739
    %v1012 = vpack.c.b16 %v748, %v740
    %v1013 = vpack.c.b16 %v749, %v741
    %v1014 = vpack.c.b16 %v750, %v742
    %v1015 = vpack.c.b16 %v751, %v743
    %v1016 = vpack.c.b16 %v752, %v744
    %v1017 = vpack.c.b16 %v753, %v745
    %v1018 = vpack.c.b16 %v762, %v754
    %v1019 = vpack.c.b16 %v763, %v755
    %v1020 = vpack.c.b16 %v764, %v756
    %v1021 = vpack.c.b16 %v765, %v757
    %v1022 = vpack.c.b16 %v766, %v758
    %v1023 = vpack.c.b16 %v767, %v759
    %v1024 = vpack.c.b16 %v768, %v760
    %v1025 = vpack.c.b16 %v769, %v761
    %v1026 = vpack.c.b16 %v778, %v770
    %v1027 = vpack.c.b16 %v779, %v771
    %v1028 = vpack.c.b16 %v780, %v772
    %v1029 = vpack.c.b16 %v781, %v773
    %v1030 = vpack.c.b16 %v782, %v774
    %v1031 = vpack.c.b16 %v783, %v775
    %v1032 = vpack.c.b16 %v784, %v776
    %v1033 = vpack.c.b16 %v785, %v777
    %v1034 = vpack.c.b16 %v794, %v786
    %v1035 = vpack.c.b16 %v795, %v787
    %v1036 = vpack.c.b16 %v796, %v788
    %v1037 = vpack.c.b16 %v797, %v789
    %v1038 = vpack.c.b16 %v798, %v790
    %v1039 = vpack.c.b16 %v799, %v791
    %v1040 = vpack.c.b16 %v800, %v792
    %v1041 = vpack.c.b16 %v801, %v793
    %v1042 = vpack.c.b16 %v810, %v802
    %v1043 = vpack.c.b16 %v811, %v803
    %v1044 = vpack.c.b16 %v812, %v804
    %v1045 = vpack.c.b16 %v813, %v805
    %v1046 = vpack.c.b16 %v814, %v806
    %v1047 = vpack.c.b16 %v815, %v807
    %v1048 = vpack.c.b16 %v816, %v808
    %v1049 = vpack.c.b16 %v817, %v809
    %v1050 = vpack.c.b16 %v826, %v818
    %v1051 = vpack.c.b16 %v827, %v819
    %v1052 = vpack.c.b16 %v828, %v820
    %v1053 = vpack.c.b16 %v829, %v821
    %v1054 = vpack.c.b16 %v830, %v822
    %v1055 = vpack.c.b16 %v831, %v823
    %v1056 = vpack.c.b16 %v832, %v824
    %v1057 = vpack.c.b16 %v833, %v825
    %v1058 = vpack.c.b16 %v842, %v834
    %v1059 = vpack.c.b16 %v843, %v835
    %v1060 = vpack.c.b16 %v844, %v836
    %v1061 = vpack.c.b16 %v845, %v837
    %v1062 = vpack.c.b16 %v846, %v838
    %v1063 = vpack.c.b16 %v847, %v839
    %v1064 = vpack.c.b16 %v848, %v840
    %v1065 = vpack.c.b16 %v849, %v841
    %v1066 = vpack.c.b16 %v858, %v850
    %v1067 = vpack.c.b16 %v859, %v851
    %v1068 = vpack.c.b16 %v860, %v852
    %v1069 = vpack.c.b16 %v861, %v853
    %v1070 = vpack.c.b16 %v862, %v854
    %v1071 = vpack.c.b16 %v863, %v855
    %v1072 = vpack.c.b16 %v864, %v856
    %v1073 = vpack.c.b16 %v865, %v857
    %v1074 = vpack.c.b16 %v874, %v866
    %v1075 = vpack.c.b16 %v875, %v867
    %v1076 = vpack.c.b16 %v876, %v868
    %v1077 = vpack.c.b16 %v877, %v869
    %v1078 = vpack.c.b16 %v878, %v870
    %v1079 = vpack.c.b16 %v879, %v871
    %v1080 = vpack.c.b16 %v880, %v872
    %v1081 = vpack.c.b16 %v881, %v873
    %v1082 = vpack.c.b16 %v890, %v882
    %v1083 = vpack.c.b16 %v891, %v883
    %v1084 = vpack.c.b16 %v892, %v884
    %v1085 = vpack.c.b16 %v893, %v885
    %v1086 = vpack.c.b16 %v894, %v886
    %v1087 = vpack.c.b16 %v895, %v887
    %v1088 = vpack.c.b16 %v896, %v888
    %v1089 = vpack.c.b16 %v897, %v889
    %1282 = vmatprep.subr.bf16.mxu0 %v955
    %1283 = vmatpush1.bf16.msra.mxu0 %v954
    %1284 = vmatprep.subr.bf16.mxu0 %v947
    %1285 = vmatpush1.bf16.msra.mxu0 %v946
    %1286 = vmatprep.subr.bf16.mxu0 %v939
    %1287 = vmatpush1.bf16.msra.mxu0 %v938
    %1288 = vmatprep.subr.bf16.mxu0 %v931
    %1289 = vmatpush1.bf16.msra.mxu0 %v930
    %1290 = vmatprep.subr.bf16.mxu0 %v923
    %1291 = vmatpush1.bf16.msra.mxu0 %v922
    %1292 = vmatprep.subr.bf16.mxu0 %v915
    %1293 = vmatpush1.bf16.msra.mxu0 %v914
    %1294 = vmatprep.subr.bf16.mxu0 %v907
    %1295 = vmatpush1.bf16.msra.mxu0 %v906
    %1296 = vmatprep.subr.bf16.mxu0 %v899
    %1297 = vmatpush1.bf16.msra.mxu0 %v898
    %1298 = vmatprep.subr.bf16.mxu0 %v1019
    %1299 = vmatpush2.bf16.msra.mxu0 %v1018
    %1300 = vmatprep.subr.bf16.mxu0 %v1011
    %1301 = vmatpush2.bf16.msra.mxu0 %v1010
    %1302 = vmatprep.subr.bf16.mxu0 %v1003
    %1303 = vmatpush2.bf16.msra.mxu0 %v1002
    %1304 = vmatprep.subr.bf16.mxu0 %v995
    %1305 = vmatpush2.bf16.msra.mxu0 %v994
    %1306 = vmatprep.subr.bf16.mxu0 %v987
    %1307 = vmatpush2.bf16.msra.mxu0 %v986
    %1308 = vmatprep.subr.bf16.mxu0 %v979
    %1309 = vmatpush2.bf16.msra.mxu0 %v978
    %1310 = vmatprep.subr.bf16.mxu0 %v971
    %1311 = vmatpush2.bf16.msra.mxu0 %v970
    %1312 = vmatprep.subr.bf16.mxu0 %v963
    %1313 = vmatpush2.bf16.msra.mxu0 %v962
    %1314 = vmatprep.mubr.bf16.mxu0 %v317
    %1315 = vmatmul.mubr.bf16.gmra.mxu0 %v316
    %v1316 = vpop.f32.mrf.mxu0
    %v1317 = vadd.f32 %v269, %v1316
    %v1318 = vpop.f32.mrf.mxu0
    %v1319 = vadd.f32 %v273, %v1318
    %v1320 = vpop.f32.mrf.mxu0
    %v1321 = vadd.f32 %v269, %v1320
    %v1322 = vpop.f32.mrf.mxu0
    %v1323 = vadd.f32 %v273, %v1322
    %1324 = vdwg.mxu0
    %1325 = vmatprep.subr.bf16.mxu0 %v1083
    %1326 = vmatpush1.bf16.msra.mxu0 %v1082
    %1327 = vmatprep.subr.bf16.mxu0 %v1075
    %1328 = vmatpush1.bf16.msra.mxu0 %v1074
    %1329 = vmatprep.subr.bf16.mxu0 %v1067
    %1330 = vmatpush1.bf16.msra.mxu0 %v1066
    %1331 = vmatprep.subr.bf16.mxu0 %v1059
    %1332 = vmatpush1.bf16.msra.mxu0 %v1058
    %1333 = vmatprep.subr.bf16.mxu0 %v1051
    %1334 = vmatpush1.bf16.msra.mxu0 %v1050
    %1335 = vmatprep.subr.bf16.mxu0 %v1043
    %1336 = vmatpush1.bf16.msra.mxu0 %v1042
    %1337 = vmatprep.subr.bf16.mxu0 %v1035
    %1338 = vmatpush1.bf16.msra.mxu0 %v1034
    %1339 = vmatprep.subr.bf16.mxu0 %v1027
    %1340 = vmatpush1.bf16.msra.mxu0 %v1026
    %1341 = vmatprep.subr.bf16.mxu0 0
    %1342 = vmatpush2.bf16.msra.mxu0 0
    %1343 = vmatprep.subr.bf16.mxu0 0
    %1344 = vmatpush2.bf16.msra.mxu0 0
    %1345 = vmatprep.subr.bf16.mxu0 0
    %1346 = vmatpush2.bf16.msra.mxu0 0
    %1347 = vmatprep.subr.bf16.mxu0 0
    %1348 = vmatpush2.bf16.msra.mxu0 0
    %1349 = vmatprep.subr.bf16.mxu0 0
    %1350 = vmatpush2.bf16.msra.mxu0 0
    %1351 = vmatprep.subr.bf16.mxu0 0
    %1352 = vmatpush2.bf16.msra.mxu0 0
    %1353 = vmatprep.subr.bf16.mxu0 0
    %1354 = vmatpush2.bf16.msra.mxu0 0
    %1355 = vmatprep.subr.bf16.mxu0 0
    %1356 = vmatpush2.bf16.msra.mxu0 0
    %1357 = vmatprep.mubr.bf16.mxu0 0
    %1358 = vmatmul.mubr.bf16.gmra.mxu0 %v318
    %v1359 = vpop.f32.mrf.mxu0
    %v1360 = vadd.f32 %v1317, %v1359
    %v1361 = vpop.f32.mrf.mxu0
    %v1362 = vadd.f32 %v1319, %v1361
    %v1363 = vpop.f32.mrf.mxu0
    %v1364 = vadd.f32 %v1321, %v1363
    %v1365 = vpop.f32.mrf.mxu0
    %v1366 = vadd.f32 %v1323, %v1365
    %1367 = vdwg.mxu0
    %1368 = vmatprep.subr.bf16.mxu0 %v957
    %1369 = vmatpush1.bf16.msra.mxu0 %v956
    %1370 = vmatprep.subr.bf16.mxu0 %v949
    %1371 = vmatpush1.bf16.msra.mxu0 %v948
    %1372 = vmatprep.subr.bf16.mxu0 %v941
    %1373 = vmatpush1.bf16.msra.mxu0 %v940
    %1374 = vmatprep.subr.bf16.mxu0 %v933
    %1375 = vmatpush1.bf16.msra.mxu0 %v932
    %1376 = vmatprep.subr.bf16.mxu0 %v925
    %1377 = vmatpush1.bf16.msra.mxu0 %v924
    %1378 = vmatprep.subr.bf16.mxu0 %v917
    %1379 = vmatpush1.bf16.msra.mxu0 %v916
    %1380 = vmatprep.subr.bf16.mxu0 %v909
    %1381 = vmatpush1.bf16.msra.mxu0 %v908
    %1382 = vmatprep.subr.bf16.mxu0 %v901
    %1383 = vmatpush1.bf16.msra.mxu0 %v900
    %1384 = vmatprep.subr.bf16.mxu0 %v1021
    %1385 = vmatpush2.bf16.msra.mxu0 %v1020
    %1386 = vmatprep.subr.bf16.mxu0 %v1013
    %1387 = vmatpush2.bf16.msra.mxu0 %v1012
    %1388 = vmatprep.subr.bf16.mxu0 %v1005
    %1389 = vmatpush2.bf16.msra.mxu0 %v1004
    %1390 = vmatprep.subr.bf16.mxu0 %v997
    %1391 = vmatpush2.bf16.msra.mxu0 %v996
    %1392 = vmatprep.subr.bf16.mxu0 %v989
    %1393 = vmatpush2.bf16.msra.mxu0 %v988
    %1394 = vmatprep.subr.bf16.mxu0 %v981
    %1395 = vmatpush2.bf16.msra.mxu0 %v980
    %1396 = vmatprep.subr.bf16.mxu0 %v973
    %1397 = vmatpush2.bf16.msra.mxu0 %v972
    %1398 = vmatprep.subr.bf16.mxu0 %v965
    %1399 = vmatpush2.bf16.msra.mxu0 %v964
    %1400 = vmatprep.mubr.bf16.mxu0 %v317
    %1401 = vmatmul.mubr.bf16.gmra.mxu0 %v316
    %v1402 = vpop.f32.mrf.mxu0
    %v1403 = vadd.f32 %v277, %v1402
    %v1404 = vpop.f32.mrf.mxu0
    %v1405 = vadd.f32 %v281, %v1404
    %v1406 = vpop.f32.mrf.mxu0
    %v1407 = vadd.f32 %v277, %v1406
    %v1408 = vpop.f32.mrf.mxu0
    %v1409 = vadd.f32 %v281, %v1408
    %1410 = vdwg.mxu0
    %1411 = vmatprep.subr.bf16.mxu0 %v1085
    %1412 = vmatpush1.bf16.msra.mxu0 %v1084
    %1413 = vmatprep.subr.bf16.mxu0 %v1077
    %1414 = vmatpush1.bf16.msra.mxu0 %v1076
    %1415 = vmatprep.subr.bf16.mxu0 %v1069
    %1416 = vmatpush1.bf16.msra.mxu0 %v1068
    %1417 = vmatprep.subr.bf16.mxu0 %v1061
    %1418 = vmatpush1.bf16.msra.mxu0 %v1060
    %1419 = vmatprep.subr.bf16.mxu0 %v1053
    %1420 = vmatpush1.bf16.msra.mxu0 %v1052
    %1421 = vmatprep.subr.bf16.mxu0 %v1045
    %1422 = vmatpush1.bf16.msra.mxu0 %v1044
    %1423 = vmatprep.subr.bf16.mxu0 %v1037
    %1424 = vmatpush1.bf16.msra.mxu0 %v1036
    %1425 = vmatprep.subr.bf16.mxu0 %v1029
    %1426 = vmatpush1.bf16.msra.mxu0 %v1028
    %1427 = vmatprep.subr.bf16.mxu0 0
    %1428 = vmatpush2.bf16.msra.mxu0 0
    %1429 = vmatprep.subr.bf16.mxu0 0
    %1430 = vmatpush2.bf16.msra.mxu0 0
    %1431 = vmatprep.subr.bf16.mxu0 0
    %1432 = vmatpush2.bf16.msra.mxu0 0
    %1433 = vmatprep.subr.bf16.mxu0 0
    %1434 = vmatpush2.bf16.msra.mxu0 0
    %1435 = vmatprep.subr.bf16.mxu0 0
    %1436 = vmatpush2.bf16.msra.mxu0 0
    %1437 = vmatprep.subr.bf16.mxu0 0
    %1438 = vmatpush2.bf16.msra.mxu0 0
    %1439 = vmatprep.subr.bf16.mxu0 0
    %1440 = vmatpush2.bf16.msra.mxu0 0
    %1441 = vmatprep.subr.bf16.mxu0 0
    %1442 = vmatpush2.bf16.msra.mxu0 0
    %1443 = vmatprep.mubr.bf16.mxu0 0
    %1444 = vmatmul.mubr.bf16.gmra.mxu0 %v318
    %v1445 = vpop.f32.mrf.mxu0
    %v1446 = vadd.f32 %v1403, %v1445
    %v1447 = vpop.f32.mrf.mxu0
    %v1448 = vadd.f32 %v1405, %v1447
    %v1449 = vpop.f32.mrf.mxu0
    %v1450 = vadd.f32 %v1407, %v1449
    %v1451 = vpop.f32.mrf.mxu0
    %v1452 = vadd.f32 %v1409, %v1451
    %1453 = vdwg.mxu0
    %1454 = vmatprep.subr.bf16.mxu0 %v959
    %1455 = vmatpush1.bf16.msra.mxu0 %v958
    %1456 = vmatprep.subr.bf16.mxu0 %v951
    %1457 = vmatpush1.bf16.msra.mxu0 %v950
    %1458 = vmatprep.subr.bf16.mxu0 %v943
    %1459 = vmatpush1.bf16.msra.mxu0 %v942
    %1460 = vmatprep.subr.bf16.mxu0 %v935
    %1461 = vmatpush1.bf16.msra.mxu0 %v934
    %1462 = vmatprep.subr.bf16.mxu0 %v927
    %1463 = vmatpush1.bf16.msra.mxu0 %v926
    %1464 = vmatprep.subr.bf16.mxu0 %v919
    %1465 = vmatpush1.bf16.msra.mxu0 %v918
    %1466 = vmatprep.subr.bf16.mxu0 %v911
    %1467 = vmatpush1.bf16.msra.mxu0 %v910
    %1468 = vmatprep.subr.bf16.mxu0 %v903
    %1469 = vmatpush1.bf16.msra.mxu0 %v902
    %1470 = vmatprep.subr.bf16.mxu0 %v1023
    %1471 = vmatpush2.bf16.msra.mxu0 %v1022
    %1472 = vmatprep.subr.bf16.mxu0 %v1015
    %1473 = vmatpush2.bf16.msra.mxu0 %v1014
    %1474 = vmatprep.subr.bf16.mxu0 %v1007
    %1475 = vmatpush2.bf16.msra.mxu0 %v1006
    %1476 = vmatprep.subr.bf16.mxu0 %v999
    %1477 = vmatpush2.bf16.msra.mxu0 %v998
    %1478 = vmatprep.subr.bf16.mxu0 %v991
    %1479 = vmatpush2.bf16.msra.mxu0 %v990
    %1480 = vmatprep.subr.bf16.mxu0 %v983
    %1481 = vmatpush2.bf16.msra.mxu0 %v982
    %1482 = vmatprep.subr.bf16.mxu0 %v975
    %1483 = vmatpush2.bf16.msra.mxu0 %v974
    %1484 = vmatprep.subr.bf16.mxu0 %v967
    %1485 = vmatpush2.bf16.msra.mxu0 %v966
    %1486 = vmatprep.mubr.bf16.mxu0 %v317
    %1487 = vmatmul.mubr.bf16.gmra.mxu0 %v316
    %v1488 = vpop.f32.mrf.mxu0
    %v1489 = vadd.f32 %v285, %v1488
    %v1490 = vpop.f32.mrf.mxu0
    %v1491 = vadd.f32 %v289, %v1490
    %v1492 = vpop.f32.mrf.mxu0
    %v1493 = vadd.f32 %v285, %v1492
    %v1494 = vpop.f32.mrf.mxu0
    %v1495 = vadd.f32 %v289, %v1494
    %1496 = vdwg.mxu0
    %1497 = vmatprep.subr.bf16.mxu0 %v1087
    %1498 = vmatpush1.bf16.msra.mxu0 %v1086
    %1499 = vmatprep.subr.bf16.mxu0 %v1079
    %1500 = vmatpush1.bf16.msra.mxu0 %v1078
    %1501 = vmatprep.subr.bf16.mxu0 %v1071
    %1502 = vmatpush1.bf16.msra.mxu0 %v1070
    %1503 = vmatprep.subr.bf16.mxu0 %v1063
    %1504 = vmatpush1.bf16.msra.mxu0 %v1062
    %1505 = vmatprep.subr.bf16.mxu0 %v1055
    %1506 = vmatpush1.bf16.msra.mxu0 %v1054
    %1507 = vmatprep.subr.bf16.mxu0 %v1047
    %1508 = vmatpush1.bf16.msra.mxu0 %v1046
    %1509 = vmatprep.subr.bf16.mxu0 %v1039
    %1510 = vmatpush1.bf16.msra.mxu0 %v1038
    %1511 = vmatprep.subr.bf16.mxu0 %v1031
    %1512 = vmatpush1.bf16.msra.mxu0 %v1030
    %1513 = vmatprep.subr.bf16.mxu0 0
    %1514 = vmatpush2.bf16.msra.mxu0 0
    %1515 = vmatprep.subr.bf16.mxu0 0
    %1516 = vmatpush2.bf16.msra.mxu0 0
    %1517 = vmatprep.subr.bf16.mxu0 0
    %1518 = vmatpush2.bf16.msra.mxu0 0
    %1519 = vmatprep.subr.bf16.mxu0 0
    %1520 = vmatpush2.bf16.msra.mxu0 0
    %1521 = vmatprep.subr.bf16.mxu0 0
    %1522 = vmatpush2.bf16.msra.mxu0 0
    %1523 = vmatprep.subr.bf16.mxu0 0
    %1524 = vmatpush2.bf16.msra.mxu0 0
    %1525 = vmatprep.subr.bf16.mxu0 0
    %1526 = vmatpush2.bf16.msra.mxu0 0
    %1527 = vmatprep.subr.bf16.mxu0 0
    %1528 = vmatpush2.bf16.msra.mxu0 0
    %1529 = vmatprep.mubr.bf16.mxu0 0
    %1530 = vmatmul.mubr.bf16.gmra.mxu0 %v318
    %v1531 = vpop.f32.mrf.mxu0
    %v1532 = vadd.f32 %v1489, %v1531
    %v1533 = vpop.f32.mrf.mxu0
    %v1534 = vadd.f32 %v1491, %v1533
    %v1535 = vpop.f32.mrf.mxu0
    %v1536 = vadd.f32 %v1493, %v1535
    %v1537 = vpop.f32.mrf.mxu0
    %v1538 = vadd.f32 %v1495, %v1537
    %1539 = vdwg.mxu0
    %1540 = vmatprep.subr.bf16.mxu0 %v961
    %1541 = vmatpush1.bf16.msra.mxu0 %v960
    %1542 = vmatprep.subr.bf16.mxu0 %v953
    %1543 = vmatpush1.bf16.msra.mxu0 %v952
    %1544 = vmatprep.subr.bf16.mxu0 %v945
    %1545 = vmatpush1.bf16.msra.mxu0 %v944
    %1546 = vmatprep.subr.bf16.mxu0 %v937
    %1547 = vmatpush1.bf16.msra.mxu0 %v936
    %1548 = vmatprep.subr.bf16.mxu0 %v929
    %1549 = vmatpush1.bf16.msra.mxu0 %v928
    %1550 = vmatprep.subr.bf16.mxu0 %v921
    %1551 = vmatpush1.bf16.msra.mxu0 %v920
    %1552 = vmatprep.subr.bf16.mxu0 %v913
    %1553 = vmatpush1.bf16.msra.mxu0 %v912
    %1554 = vmatprep.subr.bf16.mxu0 %v905
    %1555 = vmatpush1.bf16.msra.mxu0 %v904
    %1556 = vmatprep.subr.bf16.mxu0 %v1025
    %1557 = vmatpush2.bf16.msra.mxu0 %v1024
    %1558 = vmatprep.subr.bf16.mxu0 %v1017
    %1559 = vmatpush2.bf16.msra.mxu0 %v1016
    %1560 = vmatprep.subr.bf16.mxu0 %v1009
    %1561 = vmatpush2.bf16.msra.mxu0 %v1008
    %1562 = vmatprep.subr.bf16.mxu0 %v1001
    %1563 = vmatpush2.bf16.msra.mxu0 %v1000
    %1564 = vmatprep.subr.bf16.mxu0 %v993
    %1565 = vmatpush2.bf16.msra.mxu0 %v992
    %1566 = vmatprep.subr.bf16.mxu0 %v985
    %1567 = vmatpush2.bf16.msra.mxu0 %v984
    %1568 = vmatprep.subr.bf16.mxu0 %v977
    %1569 = vmatpush2.bf16.msra.mxu0 %v976
    %1570 = vmatprep.subr.bf16.mxu0 %v969
    %1571 = vmatpush2.bf16.msra.mxu0 %v968
    %1572 = vmatprep.mubr.bf16.mxu0 %v317
    %1573 = vmatmul.mubr.bf16.gmra.mxu0 %v316
    %v1574 = vpop.f32.mrf.mxu0
    %v1575 = vadd.f32 %v293, %v1574
    %v1576 = vpop.f32.mrf.mxu0
    %v1577 = vadd.f32 %v297, %v1576
    %v1578 = vpop.f32.mrf.mxu0
    %v1579 = vadd.f32 %v293, %v1578
    %v1580 = vpop.f32.mrf.mxu0
    %v1581 = vadd.f32 %v297, %v1580
    %1582 = vdwg.mxu0
    %1583 = vmatprep.subr.bf16.mxu0 %v1089
    %1584 = vmatpush1.bf16.msra.mxu0 %v1088
    %1585 = vmatprep.subr.bf16.mxu0 %v1081
    %1586 = vmatpush1.bf16.msra.mxu0 %v1080
    %1587 = vmatprep.subr.bf16.mxu0 %v1073
    %1588 = vmatpush1.bf16.msra.mxu0 %v1072
    %1589 = vmatprep.subr.bf16.mxu0 %v1065
    %1590 = vmatpush1.bf16.msra.mxu0 %v1064
    %1591 = vmatprep.subr.bf16.mxu0 %v1057
    %1592 = vmatpush1.bf16.msra.mxu0 %v1056
    %1593 = vmatprep.subr.bf16.mxu0 %v1049
    %1594 = vmatpush1.bf16.msra.mxu0 %v1048
    %1595 = vmatprep.subr.bf16.mxu0 %v1041
    %1596 = vmatpush1.bf16.msra.mxu0 %v1040
    %1597 = vmatprep.subr.bf16.mxu0 %v1033
    %1598 = vmatpush1.bf16.msra.mxu0 %v1032
    %1599 = vmatprep.subr.bf16.mxu0 0
    %1600 = vmatpush2.bf16.msra.mxu0 0
    %1601 = vmatprep.subr.bf16.mxu0 0
    %1602 = vmatpush2.bf16.msra.mxu0 0
    %1603 = vmatprep.subr.bf16.mxu0 0
    %1604 = vmatpush2.bf16.msra.mxu0 0
    %1605 = vmatprep.subr.bf16.mxu0 0
    %1606 = vmatpush2.bf16.msra.mxu0 0
    %1607 = vmatprep.subr.bf16.mxu0 0
    %1608 = vmatpush2.bf16.msra.mxu0 0
    %1609 = vmatprep.subr.bf16.mxu0 0
    %1610 = vmatpush2.bf16.msra.mxu0 0
    %1611 = vmatprep.subr.bf16.mxu0 0
    %1612 = vmatpush2.bf16.msra.mxu0 0
    %1613 = vmatprep.subr.bf16.mxu0 0
    %1614 = vmatpush2.bf16.msra.mxu0 0
    %1615 = vmatprep.mubr.bf16.mxu0 0
    %1616 = vmatmul.mubr.bf16.gmra.mxu0 %v318
    %v1617 = vpop.f32.mrf.mxu0
    %v1618 = vadd.f32 %v1575, %v1617
    %v1619 = vpop.f32.mrf.mxu0
    %v1620 = vadd.f32 %v1577, %v1619
    %v1621 = vpop.f32.mrf.mxu0
    %v1622 = vadd.f32 %v1579, %v1621
    %v1623 = vpop.f32.mrf.mxu0
    %v1624 = vadd.f32 %v1581, %v1623
    %1625 = vdwg.mxu0
    %vm1626 = vcmp.gt.f32.partialorder %v1360, 0.0
    %vm1627 = vcmp.gt.f32.partialorder %v1362, 0.0
    %vm1628 = vcmp.gt.f32.partialorder %v1446, 0.0
    %vm1629 = vcmp.gt.f32.partialorder %v1448, 0.0
    %vm1630 = vcmp.gt.f32.partialorder %v1532, 0.0
    %vm1631 = vcmp.gt.f32.partialorder %v1534, 0.0
    %vm1632 = vcmp.gt.f32.partialorder %v1618, 0.0
    %vm1633 = vcmp.gt.f32.partialorder %v1620, 0.0
    %vm1634 = vcmp.gt.f32.partialorder %v1364, 0.0
    %vm1635 = vcmp.gt.f32.partialorder %v1366, 0.0
    %vm1636 = vcmp.gt.f32.partialorder %v1450, 0.0
    %vm1637 = vcmp.gt.f32.partialorder %v1452, 0.0
    %vm1638 = vcmp.gt.f32.partialorder %v1536, 0.0
    %vm1639 = vcmp.gt.f32.partialorder %v1538, 0.0
    %vm1640 = vcmp.gt.f32.partialorder %v1622, 0.0
    %vm1641 = vcmp.gt.f32.partialorder %v1624, 0.0
    %v1642 = vmin.f32 %v1360, 0.0
    %v1643 = vmin.f32 %v1362, 0.0
    %v1644 = vmin.f32 %v1446, 0.0
    %v1645 = vmin.f32 %v1448, 0.0
    %v1646 = vmin.f32 %v1532, 0.0
    %v1647 = vmin.f32 %v1534, 0.0
    %v1648 = vmin.f32 %v1618, 0.0
    %v1649 = vmin.f32 %v1620, 0.0
    %v1650 = vmin.f32 %v1364, 0.0
    %v1651 = vmin.f32 %v1366, 0.0
    %v1652 = vmin.f32 %v1450, 0.0
    %v1653 = vmin.f32 %v1452, 0.0
    %v1654 = vmin.f32 %v1536, 0.0
    %v1655 = vmin.f32 %v1538, 0.0
    %v1656 = vmin.f32 %v1622, 0.0
    %v1657 = vmin.f32 %v1624, 0.0
    %v1658 = vmul.f32 %v1642, 1.442695
    %v1659 = vpow.pop %v1658
    %v1660 = vmul.f32 %v1643, 1.442695
    %v1661 = vpow.pop %v1660
    %v1662 = vmul.f32 %v1644, 1.442695
    %v1663 = vpow.pop %v1662
    %v1664 = vmul.f32 %v1645, 1.442695
    %v1665 = vpow.pop %v1664
    %v1666 = vmul.f32 %v1646, 1.442695
    %v1667 = vpow.pop %v1666
    %v1668 = vmul.f32 %v1647, 1.442695
    %v1669 = vpow.pop %v1668
    %v1670 = vmul.f32 %v1648, 1.442695
    %v1671 = vpow.pop %v1670
    %v1672 = vmul.f32 %v1649, 1.442695
    %v1673 = vpow.pop %v1672
    %v1674 = vmul.f32 %v1650, 1.442695
    %v1675 = vpow.pop %v1674
    %v1676 = vmul.f32 %v1651, 1.442695
    %v1677 = vpow.pop %v1676
    %v1678 = vmul.f32 %v1652, 1.442695
    %v1679 = vpow.pop %v1678
    %v1680 = vmul.f32 %v1653, 1.442695
    %v1681 = vpow.pop %v1680
    %v1682 = vmul.f32 %v1654, 1.442695
    %v1683 = vpow.pop %v1682
    %v1684 = vmul.f32 %v1655, 1.442695
    %v1685 = vpow.pop %v1684
    %v1686 = vmul.f32 %v1656, 1.442695
    %v1687 = vpow.pop %v1686
    %v1688 = vmul.f32 %v1657, 1.442695
    %v1689 = vpow.pop %v1688
    %v1690 = vsub.f32 %v1659, 1.0
    %v1691 = vsub.f32 %v1661, 1.0
    %v1692 = vsub.f32 %v1663, 1.0
    %v1693 = vsub.f32 %v1665, 1.0
    %v1694 = vsub.f32 %v1667, 1.0
    %v1695 = vsub.f32 %v1669, 1.0
    %v1696 = vsub.f32 %v1671, 1.0
    %v1697 = vsub.f32 %v1673, 1.0
    %v1698 = vsub.f32 %v1675, 1.0
    %v1699 = vsub.f32 %v1677, 1.0
    %v1700 = vsub.f32 %v1679, 1.0
    %v1701 = vsub.f32 %v1681, 1.0
    %v1702 = vsub.f32 %v1683, 1.0
    %v1703 = vsub.f32 %v1685, 1.0
    %v1704 = vsub.f32 %v1687, 1.0
    %v1705 = vsub.f32 %v1689, 1.0
    %v1706 = vsel %vm1626, %v1360, %v1690
    %v1707 = vsel %vm1627, %v1362, %v1691
    %v1708 = vsel %vm1628, %v1446, %v1692
    %v1709 = vsel %vm1629, %v1448, %v1693
    %v1710 = vsel %vm1630, %v1532, %v1694
    %v1711 = vsel %vm1631, %v1534, %v1695
    %v1712 = vsel %vm1632, %v1618, %v1696
    %v1713 = vsel %vm1633, %v1620, %v1697
    %v1714 = vsel %vm1634, %v1364, %v1698
    %v1715 = vsel %vm1635, %v1366, %v1699
    %v1716 = vsel %vm1636, %v1450, %v1700
    %v1717 = vsel %vm1637, %v1452, %v1701
    %v1718 = vsel %vm1638, %v1536, %v1702
    %v1719 = vsel %vm1639, %v1538, %v1703
    %v1720 = vsel %vm1640, %v1622, %v1704
    %v1721 = vsel %vm1641, %v1624, %v1705
    %v1722 = vpack.c.bf16 %v1714, %v1706
    %v1723 = vpack.c.bf16 %v1715, %v1707
    %v1724 = vpack.c.bf16 %v1716, %v1708
    %v1725 = vpack.c.bf16 %v1717, %v1709
    %v1726 = vpack.c.bf16 %v1718, %v1710
    %v1727 = vpack.c.bf16 %v1719, %v1711
    %v1728 = vpack.c.bf16 %v1720, %v1712
    %v1729 = vpack.c.bf16 %v1721, %v1713
    %v1730 = vld [vmem:[#allocation4] sm:$0xff]
    %v1731 = vld [vmem:[#allocation4 + $0x8] sm:$0xff]
    %v1732 = vld [vmem:[#allocation4 + $0x10] sm:$0xff]
    %v1733 = vld [vmem:[#allocation4 + $0x18] sm:$0xff]
    %v1734 = vld [vmem:[#allocation4 + $0x20] sm:$0xff]
    %v1735 = vld [vmem:[#allocation4 + $0x28] sm:$0xff]
    %v1736 = vld [vmem:[#allocation4 + $0x30] sm:$0xff]
    %v1737 = vld [vmem:[#allocation4 + $0x38] sm:$0xff]
    %v1738 = vld [vmem:[#allocation4 + $0x40] sm:$0xff]
    %v1739 = vld [vmem:[#allocation4 + $0x48] sm:$0xff]
    %v1740 = vld [vmem:[#allocation4 + $0x50] sm:$0xff]
    %v1741 = vld [vmem:[#allocation4 + $0x58] sm:$0xff]
    %v1742 = vld [vmem:[#allocation4 + $0x60] sm:$0xff]
    %v1743 = vld [vmem:[#allocation4 + $0x68] sm:$0xff]
    %v1744 = vld [vmem:[#allocation4 + $0x70] sm:$0xff]
    %v1745 = vld [vmem:[#allocation4 + $0x78] sm:$0xff]
    %v1746 = vld [vmem:[#allocation4 + $0x80] sm:$0xff]
    %v1747 = vld [vmem:[#allocation4 + $0x88] sm:$0xff]
    %v1748 = vld [vmem:[#allocation4 + $0x90] sm:$0xff]
    %v1749 = vld [vmem:[#allocation4 + $0x98] sm:$0xff]
    %v1750 = vld [vmem:[#allocation4 + $0xa0] sm:$0xff]
    %v1751 = vld [vmem:[#allocation4 + $0xa8] sm:$0xff]
    %v1752 = vld [vmem:[#allocation4 + $0xb0] sm:$0xff]
    %v1753 = vld [vmem:[#allocation4 + $0xb8] sm:$0xff]
    %v1754 = vld [vmem:[#allocation4 + $0xc0] sm:$0xff]
    %v1755 = vld [vmem:[#allocation4 + $0xc8] sm:$0xff]
    %v1756 = vld [vmem:[#allocation4 + $0xd0] sm:$0xff]
    %v1757 = vld [vmem:[#allocation4 + $0xd8] sm:$0xff]
    %v1758 = vld [vmem:[#allocation4 + $0xe0] sm:$0xff]
    %v1759 = vld [vmem:[#allocation4 + $0xe8] sm:$0xff]
    %v1760 = vld [vmem:[#allocation4 + $0xf0] sm:$0xff]
    %v1761 = vld [vmem:[#allocation4 + $0xf8] sm:$0xff]
    %v1762 = vld [vmem:[#allocation4 + $0x100] sm:$0xff]
    %v1763 = vld [vmem:[#allocation4 + $0x108] sm:$0xff]
    %v1764 = vld [vmem:[#allocation4 + $0x110] sm:$0xff]
    %v1765 = vld [vmem:[#allocation4 + $0x118] sm:$0xff]
    %v1766 = vld [vmem:[#allocation4 + $0x120] sm:$0xff]
    %v1767 = vld [vmem:[#allocation4 + $0x128] sm:$0xff]
    %v1768 = vld [vmem:[#allocation4 + $0x130] sm:$0xff]
    %v1769 = vld [vmem:[#allocation4 + $0x138] sm:$0xff]
    %v1770 = vld [vmem:[#allocation4 + $0x140] sm:$0xff]
    %v1771 = vld [vmem:[#allocation4 + $0x148] sm:$0xff]
    %v1772 = vld [vmem:[#allocation4 + $0x150] sm:$0xff]
    %v1773 = vld [vmem:[#allocation4 + $0x158] sm:$0xff]
    %v1774 = vld [vmem:[#allocation4 + $0x160] sm:$0xff]
    %v1775 = vld [vmem:[#allocation4 + $0x168] sm:$0xff]
    %v1776 = vld [vmem:[#allocation4 + $0x170] sm:$0xff]
    %v1777 = vld [vmem:[#allocation4 + $0x178] sm:$0xff]
    %v1778 = vld [vmem:[#allocation4 + $0x180] sm:$0xff]
    %v1779 = vld [vmem:[#allocation4 + $0x188] sm:$0xff]
    %v1780 = vld [vmem:[#allocation4 + $0x190] sm:$0xff]
    %v1781 = vld [vmem:[#allocation4 + $0x198] sm:$0xff]
    %v1782 = vld [vmem:[#allocation4 + $0x1a0] sm:$0xff]
    %v1783 = vld [vmem:[#allocation4 + $0x1a8] sm:$0xff]
    %v1784 = vld [vmem:[#allocation4 + $0x1b0] sm:$0xff]
    %v1785 = vld [vmem:[#allocation4 + $0x1b8] sm:$0xff]
    %v1786 = vld [vmem:[#allocation4 + $0x1c0] sm:$0xff]
    %v1787 = vld [vmem:[#allocation4 + $0x1c8] sm:$0xff]
    %v1788 = vld [vmem:[#allocation4 + $0x1d0] sm:$0xff]
    %v1789 = vld [vmem:[#allocation4 + $0x1d8] sm:$0xff]
    %v1790 = vld [vmem:[#allocation4 + $0x1e0] sm:$0xff]
    %v1791 = vld [vmem:[#allocation4 + $0x1e8] sm:$0xff]
    %v1792 = vld [vmem:[#allocation4 + $0x1f0] sm:$0xff]
    %v1793 = vld [vmem:[#allocation4 + $0x1f8] sm:$0xff]
    %v1794 = vld [vmem:[#allocation4 + $0x200] sm:$0xff]
    %v1795 = vld [vmem:[#allocation4 + $0x208] sm:$0xff]
    %v1796 = vld [vmem:[#allocation4 + $0x210] sm:$0xff]
    %v1797 = vld [vmem:[#allocation4 + $0x218] sm:$0xff]
    %v1798 = vld [vmem:[#allocation4 + $0x220] sm:$0xff]
    %v1799 = vld [vmem:[#allocation4 + $0x228] sm:$0xff]
    %v1800 = vld [vmem:[#allocation4 + $0x230] sm:$0xff]
    %v1801 = vld [vmem:[#allocation4 + $0x238] sm:$0xff]
    %v1802 = vld [vmem:[#allocation4 + $0x240] sm:$0xff]
    %v1803 = vld [vmem:[#allocation4 + $0x248] sm:$0xff]
    %v1804 = vld [vmem:[#allocation4 + $0x250] sm:$0xff]
    %v1805 = vld [vmem:[#allocation4 + $0x258] sm:$0xff]
    %v1806 = vld [vmem:[#allocation4 + $0x260] sm:$0xff]
    %v1807 = vld [vmem:[#allocation4 + $0x268] sm:$0xff]
    %v1808 = vld [vmem:[#allocation4 + $0x270] sm:$0xff]
    %v1809 = vld [vmem:[#allocation4 + $0x278] sm:$0xff]
    %v1810 = vld [vmem:[#allocation4 + $0x280] sm:$0xff]
    %v1811 = vld [vmem:[#allocation4 + $0x288] sm:$0xff]
    %v1812 = vld [vmem:[#allocation4 + $0x290] sm:$0xff]
    %v1813 = vld [vmem:[#allocation4 + $0x298] sm:$0xff]
    %v1814 = vld [vmem:[#allocation4 + $0x2a0] sm:$0xff]
    %v1815 = vld [vmem:[#allocation4 + $0x2a8] sm:$0xff]
    %v1816 = vld [vmem:[#allocation4 + $0x2b0] sm:$0xff]
    %v1817 = vld [vmem:[#allocation4 + $0x2b8] sm:$0xff]
    %v1818 = vld [vmem:[#allocation4 + $0x2c0] sm:$0xff]
    %v1819 = vld [vmem:[#allocation4 + $0x2c8] sm:$0xff]
    %v1820 = vld [vmem:[#allocation4 + $0x2d0] sm:$0xff]
    %v1821 = vld [vmem:[#allocation4 + $0x2d8] sm:$0xff]
    %v1822 = vld [vmem:[#allocation4 + $0x2e0] sm:$0xff]
    %v1823 = vld [vmem:[#allocation4 + $0x2e8] sm:$0xff]
    %v1824 = vld [vmem:[#allocation4 + $0x2f0] sm:$0xff]
    %v1825 = vld [vmem:[#allocation4 + $0x2f8] sm:$0xff]
    %v1826 = vld [vmem:[#allocation4 + $0x300] sm:$0xff]
    %v1827 = vld [vmem:[#allocation4 + $0x308] sm:$0xff]
    %v1828 = vld [vmem:[#allocation4 + $0x310] sm:$0xff]
    %v1829 = vld [vmem:[#allocation4 + $0x318] sm:$0xff]
    %v1830 = vld [vmem:[#allocation4 + $0x320] sm:$0xff]
    %v1831 = vld [vmem:[#allocation4 + $0x328] sm:$0xff]
    %v1832 = vld [vmem:[#allocation4 + $0x330] sm:$0xff]
    %v1833 = vld [vmem:[#allocation4 + $0x338] sm:$0xff]
    %v1834 = vld [vmem:[#allocation4 + $0x340] sm:$0xff]
    %v1835 = vld [vmem:[#allocation4 + $0x348] sm:$0xff]
    %v1836 = vld [vmem:[#allocation4 + $0x350] sm:$0xff]
    %v1837 = vld [vmem:[#allocation4 + $0x358] sm:$0xff]
    %v1838 = vld [vmem:[#allocation4 + $0x360] sm:$0xff]
    %v1839 = vld [vmem:[#allocation4 + $0x368] sm:$0xff]
    %v1840 = vld [vmem:[#allocation4 + $0x370] sm:$0xff]
    %v1841 = vld [vmem:[#allocation4 + $0x378] sm:$0xff]
    %v1842 = vld [vmem:[#allocation4 + $0x380] sm:$0xff]
    %v1843 = vld [vmem:[#allocation4 + $0x388] sm:$0xff]
    %v1844 = vld [vmem:[#allocation4 + $0x390] sm:$0xff]
    %v1845 = vld [vmem:[#allocation4 + $0x398] sm:$0xff]
    %v1846 = vld [vmem:[#allocation4 + $0x3a0] sm:$0xff]
    %v1847 = vld [vmem:[#allocation4 + $0x3a8] sm:$0xff]
    %v1848 = vld [vmem:[#allocation4 + $0x3b0] sm:$0xff]
    %v1849 = vld [vmem:[#allocation4 + $0x3b8] sm:$0xff]
    %v1850 = vld [vmem:[#allocation4 + $0x3c0] sm:$0xff]
    %v1851 = vld [vmem:[#allocation4 + $0x3c8] sm:$0xff]
    %v1852 = vld [vmem:[#allocation4 + $0x3d0] sm:$0xff]
    %v1853 = vld [vmem:[#allocation4 + $0x3d8] sm:$0xff]
    %v1854 = vld [vmem:[#allocation4 + $0x3e0] sm:$0xff]
    %v1855 = vld [vmem:[#allocation4 + $0x3e8] sm:$0xff]
    %v1856 = vld [vmem:[#allocation4 + $0x3f0] sm:$0xff]
    %v1857 = vld [vmem:[#allocation4 + $0x3f8] sm:$0xff]
    %v1858 = vld [vmem:[%s4] sm:$0x3]
    %v1860 = vlaneseq
    %v1861 = vshrl.u32 %v1860, 7
    %v1862 = vsub.s32 0, %v1861
    %v1863 = vrot.slane %v1858, %v1862
    %v1864 = vlaneseq
    %v1865 = vshrl.u32 %v1864, 7
    %v1866 = vsub.s32 1, %v1865
    %v1867 = vrot.slane %v1858, %v1866
    %v1998 = vunpack.c.l.b16 %v1730
    %v1999 = vunpack.c.h.b16 %v1730
    %v2000 = vunpack.c.l.b16 %v1731
    %v2001 = vunpack.c.h.b16 %v1731
    %v2002 = vunpack.c.l.b16 %v1732
    %v2003 = vunpack.c.h.b16 %v1732
    %v2004 = vunpack.c.l.b16 %v1733
    %v2005 = vunpack.c.h.b16 %v1733
    %v2006 = vunpack.c.l.b16 %v1734
    %v2007 = vunpack.c.h.b16 %v1734
    %v2008 = vunpack.c.l.b16 %v1735
    %v2009 = vunpack.c.h.b16 %v1735
    %v2010 = vunpack.c.l.b16 %v1736
    %v2011 = vunpack.c.h.b16 %v1736
    %v2012 = vunpack.c.l.b16 %v1737
    %v2013 = vunpack.c.h.b16 %v1737
    %v2014 = vunpack.c.l.b16 %v1738
    %v2015 = vunpack.c.h.b16 %v1738
    %v2016 = vunpack.c.l.b16 %v1739
    %v2017 = vunpack.c.h.b16 %v1739
    %v2018 = vunpack.c.l.b16 %v1740
    %v2019 = vunpack.c.h.b16 %v1740
    %v2020 = vunpack.c.l.b16 %v1741
    %v2021 = vunpack.c.h.b16 %v1741
    %v2022 = vunpack.c.l.b16 %v1742
    %v2023 = vunpack.c.h.b16 %v1742
    %v2024 = vunpack.c.l.b16 %v1743
    %v2025 = vunpack.c.h.b16 %v1743
    %v2026 = vunpack.c.l.b16 %v1744
    %v2027 = vunpack.c.h.b16 %v1744
    %v2028 = vunpack.c.l.b16 %v1745
    %v2029 = vunpack.c.h.b16 %v1745
    %v2030 = vunpack.c.l.b16 %v1746
    %v2031 = vunpack.c.h.b16 %v1746
    %v2032 = vunpack.c.l.b16 %v1747
    %v2033 = vunpack.c.h.b16 %v1747
    %v2034 = vunpack.c.l.b16 %v1748
    %v2035 = vunpack.c.h.b16 %v1748
    %v2036 = vunpack.c.l.b16 %v1749
    %v2037 = vunpack.c.h.b16 %v1749
    %v2038 = vunpack.c.l.b16 %v1750
    %v2039 = vunpack.c.h.b16 %v1750
    %v2040 = vunpack.c.l.b16 %v1751
    %v2041 = vunpack.c.h.b16 %v1751
    %v2042 = vunpack.c.l.b16 %v1752
    %v2043 = vunpack.c.h.b16 %v1752
    %v2044 = vunpack.c.l.b16 %v1753
    %v2045 = vunpack.c.h.b16 %v1753
    %v2046 = vunpack.c.l.b16 %v1754
    %v2047 = vunpack.c.h.b16 %v1754
    %v2048 = vunpack.c.l.b16 %v1755
    %v2049 = vunpack.c.h.b16 %v1755
    %v2050 = vunpack.c.l.b16 %v1756
    %v2051 = vunpack.c.h.b16 %v1756
    %v2052 = vunpack.c.l.b16 %v1757
    %v2053 = vunpack.c.h.b16 %v1757
    %v2054 = vunpack.c.l.b16 %v1758
    %v2055 = vunpack.c.h.b16 %v1758
    %v2056 = vunpack.c.l.b16 %v1759
    %v2057 = vunpack.c.h.b16 %v1759
    %v2058 = vunpack.c.l.b16 %v1760
    %v2059 = vunpack.c.h.b16 %v1760
    %v2060 = vunpack.c.l.b16 %v1761
    %v2061 = vunpack.c.h.b16 %v1761
    %v2062 = vunpack.c.l.b16 %v1762
    %v2063 = vunpack.c.h.b16 %v1762
    %v2064 = vunpack.c.l.b16 %v1763
    %v2065 = vunpack.c.h.b16 %v1763
    %v2066 = vunpack.c.l.b16 %v1764
    %v2067 = vunpack.c.h.b16 %v1764
    %v2068 = vunpack.c.l.b16 %v1765
    %v2069 = vunpack.c.h.b16 %v1765
    %v2070 = vunpack.c.l.b16 %v1766
    %v2071 = vunpack.c.h.b16 %v1766
    %v2072 = vunpack.c.l.b16 %v1767
    %v2073 = vunpack.c.h.b16 %v1767
    %v2074 = vunpack.c.l.b16 %v1768
    %v2075 = vunpack.c.h.b16 %v1768
    %v2076 = vunpack.c.l.b16 %v1769
    %v2077 = vunpack.c.h.b16 %v1769
    %v2078 = vunpack.c.l.b16 %v1770
    %v2079 = vunpack.c.h.b16 %v1770
    %v2080 = vunpack.c.l.b16 %v1771
    %v2081 = vunpack.c.h.b16 %v1771
    %v2082 = vunpack.c.l.b16 %v1772
    %v2083 = vunpack.c.h.b16 %v1772
    %v2084 = vunpack.c.l.b16 %v1773
    %v2085 = vunpack.c.h.b16 %v1773
    %v2086 = vunpack.c.l.b16 %v1774
    %v2087 = vunpack.c.h.b16 %v1774
    %v2088 = vunpack.c.l.b16 %v1775
    %v2089 = vunpack.c.h.b16 %v1775
    %v2090 = vunpack.c.l.b16 %v1776
    %v2091 = vunpack.c.h.b16 %v1776
    %v2092 = vunpack.c.l.b16 %v1777
    %v2093 = vunpack.c.h.b16 %v1777
    %v2094 = vunpack.c.l.b16 %v1778
    %v2095 = vunpack.c.h.b16 %v1778
    %v2096 = vunpack.c.l.b16 %v1779
    %v2097 = vunpack.c.h.b16 %v1779
    %v2098 = vunpack.c.l.b16 %v1780
    %v2099 = vunpack.c.h.b16 %v1780
    %v2100 = vunpack.c.l.b16 %v1781
    %v2101 = vunpack.c.h.b16 %v1781
    %v2102 = vunpack.c.l.b16 %v1782
    %v2103 = vunpack.c.h.b16 %v1782
    %v2104 = vunpack.c.l.b16 %v1783
    %v2105 = vunpack.c.h.b16 %v1783
    %v2106 = vunpack.c.l.b16 %v1784
    %v2107 = vunpack.c.h.b16 %v1784
    %v2108 = vunpack.c.l.b16 %v1785
    %v2109 = vunpack.c.h.b16 %v1785
    %v2110 = vunpack.c.l.b16 %v1786
    %v2111 = vunpack.c.h.b16 %v1786
    %v2112 = vunpack.c.l.b16 %v1787
    %v2113 = vunpack.c.h.b16 %v1787
    %v2114 = vunpack.c.l.b16 %v1788
    %v2115 = vunpack.c.h.b16 %v1788
    %v2116 = vunpack.c.l.b16 %v1789
    %v2117 = vunpack.c.h.b16 %v1789
    %v2118 = vunpack.c.l.b16 %v1790
    %v2119 = vunpack.c.h.b16 %v1790
    %v2120 = vunpack.c.l.b16 %v1791
    %v2121 = vunpack.c.h.b16 %v1791
    %v2122 = vunpack.c.l.b16 %v1792
    %v2123 = vunpack.c.h.b16 %v1792
    %v2124 = vunpack.c.l.b16 %v1793
    %v2125 = vunpack.c.h.b16 %v1793
    %v2126 = vunpack.c.l.b16 %v1794
    %v2127 = vunpack.c.h.b16 %v1794
    %v2128 = vunpack.c.l.b16 %v1795
    %v2129 = vunpack.c.h.b16 %v1795
    %v2130 = vunpack.c.l.b16 %v1796
    %v2131 = vunpack.c.h.b16 %v1796
    %v2132 = vunpack.c.l.b16 %v1797
    %v2133 = vunpack.c.h.b16 %v1797
    %v2134 = vunpack.c.l.b16 %v1798
    %v2135 = vunpack.c.h.b16 %v1798
    %v2136 = vunpack.c.l.b16 %v1799
    %v2137 = vunpack.c.h.b16 %v1799
    %v2138 = vunpack.c.l.b16 %v1800
    %v2139 = vunpack.c.h.b16 %v1800
    %v2140 = vunpack.c.l.b16 %v1801
    %v2141 = vunpack.c.h.b16 %v1801
    %v2142 = vunpack.c.l.b16 %v1802
    %v2143 = vunpack.c.h.b16 %v1802
    %v2144 = vunpack.c.l.b16 %v1803
    %v2145 = vunpack.c.h.b16 %v1803
    %v2146 = vunpack.c.l.b16 %v1804
    %v2147 = vunpack.c.h.b16 %v1804
    %v2148 = vunpack.c.l.b16 %v1805
    %v2149 = vunpack.c.h.b16 %v1805
    %v2150 = vunpack.c.l.b16 %v1806
    %v2151 = vunpack.c.h.b16 %v1806
    %v2152 = vunpack.c.l.b16 %v1807
    %v2153 = vunpack.c.h.b16 %v1807
    %v2154 = vunpack.c.l.b16 %v1808
    %v2155 = vunpack.c.h.b16 %v1808
    %v2156 = vunpack.c.l.b16 %v1809
    %v2157 = vunpack.c.h.b16 %v1809
    %v2158 = vunpack.c.l.b16 %v1810
    %v2159 = vunpack.c.h.b16 %v1810
    %v2160 = vunpack.c.l.b16 %v1811
    %v2161 = vunpack.c.h.b16 %v1811
    %v2162 = vunpack.c.l.b16 %v1812
    %v2163 = vunpack.c.h.b16 %v1812
    %v2164 = vunpack.c.l.b16 %v1813
    %v2165 = vunpack.c.h.b16 %v1813
    %v2166 = vunpack.c.l.b16 %v1814
    %v2167 = vunpack.c.h.b16 %v1814
    %v2168 = vunpack.c.l.b16 %v1815
    %v2169 = vunpack.c.h.b16 %v1815
    %v2170 = vunpack.c.l.b16 %v1816
    %v2171 = vunpack.c.h.b16 %v1816
    %v2172 = vunpack.c.l.b16 %v1817
    %v2173 = vunpack.c.h.b16 %v1817
    %v2174 = vunpack.c.l.b16 %v1818
    %v2175 = vunpack.c.h.b16 %v1818
    %v2176 = vunpack.c.l.b16 %v1819
    %v2177 = vunpack.c.h.b16 %v1819
    %v2178 = vunpack.c.l.b16 %v1820
    %v2179 = vunpack.c.h.b16 %v1820
    %v2180 = vunpack.c.l.b16 %v1821
    %v2181 = vunpack.c.h.b16 %v1821
    %v2182 = vunpack.c.l.b16 %v1822
    %v2183 = vunpack.c.h.b16 %v1822
    %v2184 = vunpack.c.l.b16 %v1823
    %v2185 = vunpack.c.h.b16 %v1823
    %v2186 = vunpack.c.l.b16 %v1824
    %v2187 = vunpack.c.h.b16 %v1824
    %v2188 = vunpack.c.l.b16 %v1825
    %v2189 = vunpack.c.h.b16 %v1825
    %v2190 = vunpack.c.l.b16 %v1826
    %v2191 = vunpack.c.h.b16 %v1826
    %v2192 = vunpack.c.l.b16 %v1827
    %v2193 = vunpack.c.h.b16 %v1827
    %v2194 = vunpack.c.l.b16 %v1828
    %v2195 = vunpack.c.h.b16 %v1828
    %v2196 = vunpack.c.l.b16 %v1829
    %v2197 = vunpack.c.h.b16 %v1829
    %v2198 = vunpack.c.l.b16 %v1830
    %v2199 = vunpack.c.h.b16 %v1830
    %v2200 = vunpack.c.l.b16 %v1831
    %v2201 = vunpack.c.h.b16 %v1831
    %v2202 = vunpack.c.l.b16 %v1832
    %v2203 = vunpack.c.h.b16 %v1832
    %v2204 = vunpack.c.l.b16 %v1833
    %v2205 = vunpack.c.h.b16 %v1833
    %v2206 = vunpack.c.l.b16 %v1834
    %v2207 = vunpack.c.h.b16 %v1834
    %v2208 = vunpack.c.l.b16 %v1835
    %v2209 = vunpack.c.h.b16 %v1835
    %v2210 = vunpack.c.l.b16 %v1836
    %v2211 = vunpack.c.h.b16 %v1836
    %v2212 = vunpack.c.l.b16 %v1837
    %v2213 = vunpack.c.h.b16 %v1837
    %v2214 = vunpack.c.l.b16 %v1838
    %v2215 = vunpack.c.h.b16 %v1838
    %v2216 = vunpack.c.l.b16 %v1839
    %v2217 = vunpack.c.h.b16 %v1839
    %v2218 = vunpack.c.l.b16 %v1840
    %v2219 = vunpack.c.h.b16 %v1840
    %v2220 = vunpack.c.l.b16 %v1841
    %v2221 = vunpack.c.h.b16 %v1841
    %v2222 = vunpack.c.l.b16 %v1842
    %v2223 = vunpack.c.h.b16 %v1842
    %v2224 = vunpack.c.l.b16 %v1843
    %v2225 = vunpack.c.h.b16 %v1843
    %v2226 = vunpack.c.l.b16 %v1844
    %v2227 = vunpack.c.h.b16 %v1844
    %v2228 = vunpack.c.l.b16 %v1845
    %v2229 = vunpack.c.h.b16 %v1845
    %v2230 = vunpack.c.l.b16 %v1846
    %v2231 = vunpack.c.h.b16 %v1846
    %v2232 = vunpack.c.l.b16 %v1847
    %v2233 = vunpack.c.h.b16 %v1847
    %v2234 = vunpack.c.l.b16 %v1848
    %v2235 = vunpack.c.h.b16 %v1848
    %v2236 = vunpack.c.l.b16 %v1849
    %v2237 = vunpack.c.h.b16 %v1849
    %v2238 = vunpack.c.l.b16 %v1850
    %v2239 = vunpack.c.h.b16 %v1850
    %v2240 = vunpack.c.l.b16 %v1851
    %v2241 = vunpack.c.h.b16 %v1851
    %v2242 = vunpack.c.l.b16 %v1852
    %v2243 = vunpack.c.h.b16 %v1852
    %v2244 = vunpack.c.l.b16 %v1853
    %v2245 = vunpack.c.h.b16 %v1853
    %v2246 = vunpack.c.l.b16 %v1854
    %v2247 = vunpack.c.h.b16 %v1854
    %v2248 = vunpack.c.l.b16 %v1855
    %v2249 = vunpack.c.h.b16 %v1855
    %v2250 = vunpack.c.l.b16 %v1856
    %v2251 = vunpack.c.h.b16 %v1856
    %v2252 = vunpack.c.l.b16 %v1857
    %v2253 = vunpack.c.h.b16 %v1857
    %v2254 = vpack.c.b16 %v2000, %v1998
    %v2255 = vpack.c.b16 %v2001, %v1999
    %v2256 = vpack.c.b16 %v2004, %v2002
    %v2257 = vpack.c.b16 %v2005, %v2003
    %v2258 = vpack.c.b16 %v2008, %v2006
    %v2259 = vpack.c.b16 %v2009, %v2007
    %v2260 = vpack.c.b16 %v2012, %v2010
    %v2261 = vpack.c.b16 %v2013, %v2011
    %v2262 = vpack.c.b16 %v2016, %v2014
    %v2263 = vpack.c.b16 %v2017, %v2015
    %v2264 = vpack.c.b16 %v2020, %v2018
    %v2265 = vpack.c.b16 %v2021, %v2019
    %v2266 = vpack.c.b16 %v2024, %v2022
    %v2267 = vpack.c.b16 %v2025, %v2023
    %v2268 = vpack.c.b16 %v2028, %v2026
    %v2269 = vpack.c.b16 %v2029, %v2027
    %v2270 = vpack.c.b16 %v2032, %v2030
    %v2271 = vpack.c.b16 %v2033, %v2031
    %v2272 = vpack.c.b16 %v2036, %v2034
    %v2273 = vpack.c.b16 %v2037, %v2035
    %v2274 = vpack.c.b16 %v2040, %v2038
    %v2275 = vpack.c.b16 %v2041, %v2039
    %v2276 = vpack.c.b16 %v2044, %v2042
    %v2277 = vpack.c.b16 %v2045, %v2043
    %v2278 = vpack.c.b16 %v2048, %v2046
    %v2279 = vpack.c.b16 %v2049, %v2047
    %v2280 = vpack.c.b16 %v2052, %v2050
    %v2281 = vpack.c.b16 %v2053, %v2051
    %v2282 = vpack.c.b16 %v2056, %v2054
    %v2283 = vpack.c.b16 %v2057, %v2055
    %v2284 = vpack.c.b16 %v2060, %v2058
    %v2285 = vpack.c.b16 %v2061, %v2059
    %v2286 = vpack.c.b16 %v2064, %v2062
    %v2287 = vpack.c.b16 %v2065, %v2063
    %v2288 = vpack.c.b16 %v2068, %v2066
    %v2289 = vpack.c.b16 %v2069, %v2067
    %v2290 = vpack.c.b16 %v2072, %v2070
    %v2291 = vpack.c.b16 %v2073, %v2071
    %v2292 = vpack.c.b16 %v2076, %v2074
    %v2293 = vpack.c.b16 %v2077, %v2075
    %v2294 = vpack.c.b16 %v2080, %v2078
    %v2295 = vpack.c.b16 %v2081, %v2079
    %v2296 = vpack.c.b16 %v2084, %v2082
    %v2297 = vpack.c.b16 %v2085, %v2083
    %v2298 = vpack.c.b16 %v2088, %v2086
    %v2299 = vpack.c.b16 %v2089, %v2087
    %v2300 = vpack.c.b16 %v2092, %v2090
    %v2301 = vpack.c.b16 %v2093, %v2091
    %v2302 = vpack.c.b16 %v2096, %v2094
    %v2303 = vpack.c.b16 %v2097, %v2095
    %v2304 = vpack.c.b16 %v2100, %v2098
    %v2305 = vpack.c.b16 %v2101, %v2099
    %v2306 = vpack.c.b16 %v2104, %v2102
    %v2307 = vpack.c.b16 %v2105, %v2103
    %v2308 = vpack.c.b16 %v2108, %v2106
    %v2309 = vpack.c.b16 %v2109, %v2107
    %v2310 = vpack.c.b16 %v2112, %v2110
    %v2311 = vpack.c.b16 %v2113, %v2111
    %v2312 = vpack.c.b16 %v2116, %v2114
    %v2313 = vpack.c.b16 %v2117, %v2115
    %v2314 = vpack.c.b16 %v2120, %v2118
    %v2315 = vpack.c.b16 %v2121, %v2119
    %v2316 = vpack.c.b16 %v2124, %v2122
    %v2317 = vpack.c.b16 %v2125, %v2123
    %v2318 = vpack.c.b16 %v2128, %v2126
    %v2319 = vpack.c.b16 %v2129, %v2127
    %v2320 = vpack.c.b16 %v2132, %v2130
    %v2321 = vpack.c.b16 %v2133, %v2131
    %v2322 = vpack.c.b16 %v2136, %v2134
    %v2323 = vpack.c.b16 %v2137, %v2135
    %v2324 = vpack.c.b16 %v2140, %v2138
    %v2325 = vpack.c.b16 %v2141, %v2139
    %v2326 = vpack.c.b16 %v2144, %v2142
    %v2327 = vpack.c.b16 %v2145, %v2143
    %v2328 = vpack.c.b16 %v2148, %v2146
    %v2329 = vpack.c.b16 %v2149, %v2147
    %v2330 = vpack.c.b16 %v2152, %v2150
    %v2331 = vpack.c.b16 %v2153, %v2151
    %v2332 = vpack.c.b16 %v2156, %v2154
    %v2333 = vpack.c.b16 %v2157, %v2155
    %v2334 = vpack.c.b16 %v2160, %v2158
    %v2335 = vpack.c.b16 %v2161, %v2159
    %v2336 = vpack.c.b16 %v2164, %v2162
    %v2337 = vpack.c.b16 %v2165, %v2163
    %v2338 = vpack.c.b16 %v2168, %v2166
    %v2339 = vpack.c.b16 %v2169, %v2167
    %v2340 = vpack.c.b16 %v2172, %v2170
    %v2341 = vpack.c.b16 %v2173, %v2171
    %v2342 = vpack.c.b16 %v2176, %v2174
    %v2343 = vpack.c.b16 %v2177, %v2175
    %v2344 = vpack.c.b16 %v2180, %v2178
    %v2345 = vpack.c.b16 %v2181, %v2179
    %v2346 = vpack.c.b16 %v2184, %v2182
    %v2347 = vpack.c.b16 %v2185, %v2183
    %v2348 = vpack.c.b16 %v2188, %v2186
    %v2349 = vpack.c.b16 %v2189, %v2187
    %v2350 = vpack.c.b16 %v2192, %v2190
    %v2351 = vpack.c.b16 %v2193, %v2191
    %v2352 = vpack.c.b16 %v2196, %v2194
    %v2353 = vpack.c.b16 %v2197, %v2195
    %v2354 = vpack.c.b16 %v2200, %v2198
    %v2355 = vpack.c.b16 %v2201, %v2199
    %v2356 = vpack.c.b16 %v2204, %v2202
    %v2357 = vpack.c.b16 %v2205, %v2203
    %v2358 = vpack.c.b16 %v2208, %v2206
    %v2359 = vpack.c.b16 %v2209, %v2207
    %v2360 = vpack.c.b16 %v2212, %v2210
    %v2361 = vpack.c.b16 %v2213, %v2211
    %v2362 = vpack.c.b16 %v2216, %v2214
    %v2363 = vpack.c.b16 %v2217, %v2215
    %v2364 = vpack.c.b16 %v2220, %v2218
    %v2365 = vpack.c.b16 %v2221, %v2219
    %v2366 = vpack.c.b16 %v2224, %v2222
    %v2367 = vpack.c.b16 %v2225, %v2223
    %v2368 = vpack.c.b16 %v2228, %v2226
    %v2369 = vpack.c.b16 %v2229, %v2227
    %v2370 = vpack.c.b16 %v2232, %v2230
    %v2371 = vpack.c.b16 %v2233, %v2231
    %v2372 = vpack.c.b16 %v2236, %v2234
    %v2373 = vpack.c.b16 %v2237, %v2235
    %v2374 = vpack.c.b16 %v2240, %v2238
    %v2375 = vpack.c.b16 %v2241, %v2239
    %v2376 = vpack.c.b16 %v2244, %v2242
    %v2377 = vpack.c.b16 %v2245, %v2243
    %v2378 = vpack.c.b16 %v2248, %v2246
    %v2379 = vpack.c.b16 %v2249, %v2247
    %v2380 = vpack.c.b16 %v2252, %v2250
    %v2381 = vpack.c.b16 %v2253, %v2251
    %2510 = vmatprep.subr.bf16.mxu0 %v2269
    %2511 = vmatpush1.bf16.msra.mxu0 %v2268
    %2512 = vmatprep.subr.bf16.mxu0 %v2267
    %2513 = vmatpush1.bf16.msra.mxu0 %v2266
    %2514 = vmatprep.subr.bf16.mxu0 %v2265
    %2515 = vmatpush1.bf16.msra.mxu0 %v2264
    %2516 = vmatprep.subr.bf16.mxu0 %v2263
    %2517 = vmatpush1.bf16.msra.mxu0 %v2262
    %2518 = vmatprep.subr.bf16.mxu0 %v2261
    %2519 = vmatpush1.bf16.msra.mxu0 %v2260
    %2520 = vmatprep.subr.bf16.mxu0 %v2259
    %2521 = vmatpush1.bf16.msra.mxu0 %v2258
    %2522 = vmatprep.subr.bf16.mxu0 %v2257
    %2523 = vmatpush1.bf16.msra.mxu0 %v2256
    %2524 = vmatprep.subr.bf16.mxu0 %v2255
    %2525 = vmatpush1.bf16.msra.mxu0 %v2254
    %2526 = vmatprep.subr.bf16.mxu0 %v2285
    %2527 = vmatpush2.bf16.msra.mxu0 %v2284
    %2528 = vmatprep.subr.bf16.mxu0 %v2283
    %2529 = vmatpush2.bf16.msra.mxu0 %v2282
    %2530 = vmatprep.subr.bf16.mxu0 %v2281
    %2531 = vmatpush2.bf16.msra.mxu0 %v2280
    %2532 = vmatprep.subr.bf16.mxu0 %v2279
    %2533 = vmatpush2.bf16.msra.mxu0 %v2278
    %2534 = vmatprep.subr.bf16.mxu0 %v2277
    %2535 = vmatpush2.bf16.msra.mxu0 %v2276
    %2536 = vmatprep.subr.bf16.mxu0 %v2275
    %2537 = vmatpush2.bf16.msra.mxu0 %v2274
    %2538 = vmatprep.subr.bf16.mxu0 %v2273
    %2539 = vmatpush2.bf16.msra.mxu0 %v2272
    %2540 = vmatprep.subr.bf16.mxu0 %v2271
    %2541 = vmatpush2.bf16.msra.mxu0 %v2270
    %2542 = vmatprep.mubr.bf16.mxu0 %v1723
    %2543 = vmatmul.mubr.bf16.gmra.mxu0 %v1722
    %v2544 = vpop.f32.mrf.mxu0
    %v2545 = vadd.f32 %v1863, %v2544
    %v2546 = vpop.f32.mrf.mxu0
    %v2547 = vadd.f32 %v1867, %v2546
    %v2548 = vpop.f32.mrf.mxu0
    %v2549 = vadd.f32 %v1863, %v2548
    %v2550 = vpop.f32.mrf.mxu0
    %v2551 = vadd.f32 %v1867, %v2550
    %2552 = vdwg.mxu0
    %2553 = vmatprep.subr.bf16.mxu0 %v2301
    %2554 = vmatpush1.bf16.msra.mxu0 %v2300
    %2555 = vmatprep.subr.bf16.mxu0 %v2299
    %2556 = vmatpush1.bf16.msra.mxu0 %v2298
    %2557 = vmatprep.subr.bf16.mxu0 %v2297
    %2558 = vmatpush1.bf16.msra.mxu0 %v2296
    %2559 = vmatprep.subr.bf16.mxu0 %v2295
    %2560 = vmatpush1.bf16.msra.mxu0 %v2294
    %2561 = vmatprep.subr.bf16.mxu0 %v2293
    %2562 = vmatpush1.bf16.msra.mxu0 %v2292
    %2563 = vmatprep.subr.bf16.mxu0 %v2291
    %2564 = vmatpush1.bf16.msra.mxu0 %v2290
    %2565 = vmatprep.subr.bf16.mxu0 %v2289
    %2566 = vmatpush1.bf16.msra.mxu0 %v2288
    %2567 = vmatprep.subr.bf16.mxu0 %v2287
    %2568 = vmatpush1.bf16.msra.mxu0 %v2286
    %2569 = vmatprep.subr.bf16.mxu0 %v2317
    %2570 = vmatpush2.bf16.msra.mxu0 %v2316
    %2571 = vmatprep.subr.bf16.mxu0 %v2315
    %2572 = vmatpush2.bf16.msra.mxu0 %v2314
    %2573 = vmatprep.subr.bf16.mxu0 %v2313
    %2574 = vmatpush2.bf16.msra.mxu0 %v2312
    %2575 = vmatprep.subr.bf16.mxu0 %v2311
    %2576 = vmatpush2.bf16.msra.mxu0 %v2310
    %2577 = vmatprep.subr.bf16.mxu0 %v2309
    %2578 = vmatpush2.bf16.msra.mxu0 %v2308
    %2579 = vmatprep.subr.bf16.mxu0 %v2307
    %2580 = vmatpush2.bf16.msra.mxu0 %v2306
    %2581 = vmatprep.subr.bf16.mxu0 %v2305
    %2582 = vmatpush2.bf16.msra.mxu0 %v2304
    %2583 = vmatprep.subr.bf16.mxu0 %v2303
    %2584 = vmatpush2.bf16.msra.mxu0 %v2302
    %2585 = vmatprep.mubr.bf16.mxu0 %v1725
    %2586 = vmatmul.mubr.bf16.gmra.mxu0 %v1724
    %v2587 = vpop.f32.mrf.mxu0
    %v2588 = vadd.f32 %v2545, %v2587
    %v2589 = vpop.f32.mrf.mxu0
    %v2590 = vadd.f32 %v2547, %v2589
    %v2591 = vpop.f32.mrf.mxu0
    %v2592 = vadd.f32 %v2549, %v2591
    %v2593 = vpop.f32.mrf.mxu0
    %v2594 = vadd.f32 %v2551, %v2593
    %2595 = vdwg.mxu0
    %2596 = vmatprep.subr.bf16.mxu0 %v2333
    %2597 = vmatpush1.bf16.msra.mxu0 %v2332
    %2598 = vmatprep.subr.bf16.mxu0 %v2331
    %2599 = vmatpush1.bf16.msra.mxu0 %v2330
    %2600 = vmatprep.subr.bf16.mxu0 %v2329
    %2601 = vmatpush1.bf16.msra.mxu0 %v2328
    %2602 = vmatprep.subr.bf16.mxu0 %v2327
    %2603 = vmatpush1.bf16.msra.mxu0 %v2326
    %2604 = vmatprep.subr.bf16.mxu0 %v2325
    %2605 = vmatpush1.bf16.msra.mxu0 %v2324
    %2606 = vmatprep.subr.bf16.mxu0 %v2323
    %2607 = vmatpush1.bf16.msra.mxu0 %v2322
    %2608 = vmatprep.subr.bf16.mxu0 %v2321
    %2609 = vmatpush1.bf16.msra.mxu0 %v2320
    %2610 = vmatprep.subr.bf16.mxu0 %v2319
    %2611 = vmatpush1.bf16.msra.mxu0 %v2318
    %2612 = vmatprep.subr.bf16.mxu0 %v2349
    %2613 = vmatpush2.bf16.msra.mxu0 %v2348
    %2614 = vmatprep.subr.bf16.mxu0 %v2347
    %2615 = vmatpush2.bf16.msra.mxu0 %v2346
    %2616 = vmatprep.subr.bf16.mxu0 %v2345
    %2617 = vmatpush2.bf16.msra.mxu0 %v2344
    %2618 = vmatprep.subr.bf16.mxu0 %v2343
    %2619 = vmatpush2.bf16.msra.mxu0 %v2342
    %2620 = vmatprep.subr.bf16.mxu0 %v2341
    %2621 = vmatpush2.bf16.msra.mxu0 %v2340
    %2622 = vmatprep.subr.bf16.mxu0 %v2339
    %2623 = vmatpush2.bf16.msra.mxu0 %v2338
    %2624 = vmatprep.subr.bf16.mxu0 %v2337
    %2625 = vmatpush2.bf16.msra.mxu0 %v2336
    %2626 = vmatprep.subr.bf16.mxu0 %v2335
    %2627 = vmatpush2.bf16.msra.mxu0 %v2334
    %2628 = vmatprep.mubr.bf16.mxu0 %v1727
    %2629 = vmatmul.mubr.bf16.gmra.mxu0 %v1726
    %v2630 = vpop.f32.mrf.mxu0
    %v2631 = vadd.f32 %v2588, %v2630
    %v2632 = vpop.f32.mrf.mxu0
    %v2633 = vadd.f32 %v2590, %v2632
    %v2634 = vpop.f32.mrf.mxu0
    %v2635 = vadd.f32 %v2592, %v2634
    %v2636 = vpop.f32.mrf.mxu0
    %v2637 = vadd.f32 %v2594, %v2636
    %2638 = vdwg.mxu0
    %2639 = vmatprep.subr.bf16.mxu0 %v2365
    %2640 = vmatpush1.bf16.msra.mxu0 %v2364
    %2641 = vmatprep.subr.bf16.mxu0 %v2363
    %2642 = vmatpush1.bf16.msra.mxu0 %v2362
    %2643 = vmatprep.subr.bf16.mxu0 %v2361
    %2644 = vmatpush1.bf16.msra.mxu0 %v2360
    %2645 = vmatprep.subr.bf16.mxu0 %v2359
    %2646 = vmatpush1.bf16.msra.mxu0 %v2358
    %2647 = vmatprep.subr.bf16.mxu0 %v2357
    %2648 = vmatpush1.bf16.msra.mxu0 %v2356
    %2649 = vmatprep.subr.bf16.mxu0 %v2355
    %2650 = vmatpush1.bf16.msra.mxu0 %v2354
    %2651 = vmatprep.subr.bf16.mxu0 %v2353
    %2652 = vmatpush1.bf16.msra.mxu0 %v2352
    %2653 = vmatprep.subr.bf16.mxu0 %v2351
    %2654 = vmatpush1.bf16.msra.mxu0 %v2350
    %2655 = vmatprep.subr.bf16.mxu0 %v2381
    %2656 = vmatpush2.bf16.msra.mxu0 %v2380
    %2657 = vmatprep.subr.bf16.mxu0 %v2379
    %2658 = vmatpush2.bf16.msra.mxu0 %v2378
    %2659 = vmatprep.subr.bf16.mxu0 %v2377
    %2660 = vmatpush2.bf16.msra.mxu0 %v2376
    %2661 = vmatprep.subr.bf16.mxu0 %v2375
    %2662 = vmatpush2.bf16.msra.mxu0 %v2374
    %2663 = vmatprep.subr.bf16.mxu0 %v2373
    %2664 = vmatpush2.bf16.msra.mxu0 %v2372
    %2665 = vmatprep.subr.bf16.mxu0 %v2371
    %2666 = vmatpush2.bf16.msra.mxu0 %v2370
    %2667 = vmatprep.subr.bf16.mxu0 %v2369
    %2668 = vmatpush2.bf16.msra.mxu0 %v2368
    %2669 = vmatprep.subr.bf16.mxu0 %v2367
    %2670 = vmatpush2.bf16.msra.mxu0 %v2366
    %2671 = vmatprep.mubr.bf16.mxu0 %v1729
    %2672 = vmatmul.mubr.bf16.gmra.mxu0 %v1728
    %v2673 = vpop.f32.mrf.mxu0
    %v2674 = vadd.f32 %v2631, %v2673
    %v2675 = vpop.f32.mrf.mxu0
    %v2676 = vadd.f32 %v2633, %v2675
    %v2677 = vpop.f32.mrf.mxu0
    %v2678 = vadd.f32 %v2635, %v2677
    %v2679 = vpop.f32.mrf.mxu0
    %v2680 = vadd.f32 %v2637, %v2679
    %2681 = vdwg.mxu0
    %vm2682 = vcmp.gt.f32.partialorder %v2674, 0.0
    %vm2683 = vcmp.gt.f32.partialorder %v2676, 0.0
    %vm2684 = vcmp.gt.f32.partialorder %v2678, 0.0
    %vm2685 = vcmp.gt.f32.partialorder %v2680, 0.0
    %v2686 = vmin.f32 %v2674, 0.0
    %v2687 = vmin.f32 %v2676, 0.0
    %v2688 = vmin.f32 %v2678, 0.0
    %v2689 = vmin.f32 %v2680, 0.0
    %v2690 = vmul.f32 %v2686, 1.442695
    %v2691 = vpow.pop %v2690
    %v2692 = vmul.f32 %v2687, 1.442695
    %v2693 = vpow.pop %v2692
    %v2694 = vmul.f32 %v2688, 1.442695
    %v2695 = vpow.pop %v2694
    %v2696 = vmul.f32 %v2689, 1.442695
    %v2697 = vpow.pop %v2696
    %v2698 = vsub.f32 %v2691, 1.0
    %v2699 = vsub.f32 %v2693, 1.0
    %v2700 = vsub.f32 %v2695, 1.0
    %v2701 = vsub.f32 %v2697, 1.0
    %v2702 = vsel %vm2682, %v2674, %v2698
    %v2703 = vsel %vm2683, %v2676, %v2699
    %v2704 = vsel %vm2684, %v2678, %v2700
    %v2705 = vsel %vm2685, %v2680, %v2701
    %v2706 = vpack.c.bf16 %v2704, %v2702
    %v2707 = vpack.c.bf16 %v2705, %v2703
    %v2708 = vld [vmem:[#allocation6] sm:$0xf]
    %v2709 = vld [vmem:[#allocation6 + $0x4] sm:$0xf]
    %v2710 = vld [vmem:[#allocation6 + $0x8] sm:$0xf]
    %v2711 = vld [vmem:[#allocation6 + $0xc] sm:$0xf]
    %v2712 = vld [vmem:[#allocation6 + $0x10] sm:$0xf]
    %v2713 = vld [vmem:[#allocation6 + $0x14] sm:$0xf]
    %v2714 = vld [vmem:[#allocation6 + $0x18] sm:$0xf]
    %v2715 = vld [vmem:[#allocation6 + $0x1c] sm:$0xf]
    %v2716 = vld [vmem:[#allocation6 + $0x20] sm:$0xf]
    %v2717 = vld [vmem:[#allocation6 + $0x24] sm:$0xf]
    %v2718 = vld [vmem:[#allocation6 + $0x28] sm:$0xf]
    %v2719 = vld [vmem:[#allocation6 + $0x2c] sm:$0xf]
    %v2720 = vld [vmem:[#allocation6 + $0x30] sm:$0xf]
    %v2721 = vld [vmem:[#allocation6 + $0x34] sm:$0xf]
    %v2722 = vld [vmem:[#allocation6 + $0x38] sm:$0xf]
    %v2723 = vld [vmem:[#allocation6 + $0x3c] sm:$0xf]
    %v2724 = vld [vmem:[#allocation6 + $0x40] sm:$0xf]
    %v2725 = vld [vmem:[#allocation6 + $0x44] sm:$0xf]
    %v2726 = vld [vmem:[#allocation6 + $0x48] sm:$0xf]
    %v2727 = vld [vmem:[#allocation6 + $0x4c] sm:$0xf]
    %v2728 = vld [vmem:[#allocation6 + $0x50] sm:$0xf]
    %v2729 = vld [vmem:[#allocation6 + $0x54] sm:$0xf]
    %v2730 = vld [vmem:[#allocation6 + $0x58] sm:$0xf]
    %v2731 = vld [vmem:[#allocation6 + $0x5c] sm:$0xf]
    %v2732 = vld [vmem:[#allocation6 + $0x60] sm:$0xf]
    %v2733 = vld [vmem:[#allocation6 + $0x64] sm:$0xf]
    %v2734 = vld [vmem:[#allocation6 + $0x68] sm:$0xf]
    %v2735 = vld [vmem:[#allocation6 + $0x6c] sm:$0xf]
    %v2736 = vld [vmem:[#allocation6 + $0x70] sm:$0xf]
    %v2737 = vld [vmem:[#allocation6 + $0x74] sm:$0xf]
    %v2738 = vld [vmem:[#allocation6 + $0x78] sm:$0xf]
    %v2739 = vld [vmem:[#allocation6 + $0x7c] sm:$0xf]
    %v2740 = vld [vmem:[%s6] sm:$0x1]
    %v2742 = vlaneseq
    %v2743 = vshrl.u32 %v2742, 7
    %v2744 = vsub.s32 0, %v2743
    %v2745 = vrot.slane %v2740, %v2744
    %v2779 = vunpack.c.l.b16 %v2708
    %v2780 = vunpack.c.l.b16 %v2709
    %v2781 = vunpack.c.l.b16 %v2710
    %v2782 = vunpack.c.l.b16 %v2711
    %v2783 = vunpack.c.l.b16 %v2712
    %v2784 = vunpack.c.l.b16 %v2713
    %v2785 = vunpack.c.l.b16 %v2714
    %v2786 = vunpack.c.l.b16 %v2715
    %v2787 = vunpack.c.l.b16 %v2716
    %v2788 = vunpack.c.l.b16 %v2717
    %v2789 = vunpack.c.l.b16 %v2718
    %v2790 = vunpack.c.l.b16 %v2719
    %v2791 = vunpack.c.l.b16 %v2720
    %v2792 = vunpack.c.l.b16 %v2721
    %v2793 = vunpack.c.l.b16 %v2722
    %v2794 = vunpack.c.l.b16 %v2723
    %v2795 = vunpack.c.l.b16 %v2724
    %v2796 = vunpack.c.l.b16 %v2725
    %v2797 = vunpack.c.l.b16 %v2726
    %v2798 = vunpack.c.l.b16 %v2727
    %v2799 = vunpack.c.l.b16 %v2728
    %v2800 = vunpack.c.l.b16 %v2729
    %v2801 = vunpack.c.l.b16 %v2730
    %v2802 = vunpack.c.l.b16 %v2731
    %v2803 = vunpack.c.l.b16 %v2732
    %v2804 = vunpack.c.l.b16 %v2733
    %v2805 = vunpack.c.l.b16 %v2734
    %v2806 = vunpack.c.l.b16 %v2735
    %v2807 = vunpack.c.l.b16 %v2736
    %v2808 = vunpack.c.l.b16 %v2737
    %v2809 = vunpack.c.l.b16 %v2738
    %v2810 = vunpack.c.l.b16 %v2739
    %v2811 = vpack.c.b16 %v2780, %v2779
    %v2812 = vpack.c.b16 %v2782, %v2781
    %v2813 = vpack.c.b16 %v2784, %v2783
    %v2814 = vpack.c.b16 %v2786, %v2785
    %v2815 = vpack.c.b16 %v2788, %v2787
    %v2816 = vpack.c.b16 %v2790, %v2789
    %v2817 = vpack.c.b16 %v2792, %v2791
    %v2818 = vpack.c.b16 %v2794, %v2793
    %v2819 = vpack.c.b16 %v2796, %v2795
    %v2820 = vpack.c.b16 %v2798, %v2797
    %v2821 = vpack.c.b16 %v2800, %v2799
    %v2822 = vpack.c.b16 %v2802, %v2801
    %v2823 = vpack.c.b16 %v2804, %v2803
    %v2824 = vpack.c.b16 %v2806, %v2805
    %v2825 = vpack.c.b16 %v2808, %v2807
    %v2826 = vpack.c.b16 %v2810, %v2809
    %2843 = vmatprep.subr.bf16.mxu0 0
    %2844 = vmatpush1.bf16.msra.mxu0 %v2818
    %2845 = vmatprep.subr.bf16.mxu0 0
    %2846 = vmatpush1.bf16.msra.mxu0 %v2817
    %2847 = vmatprep.subr.bf16.mxu0 0
    %2848 = vmatpush1.bf16.msra.mxu0 %v2816
    %2849 = vmatprep.subr.bf16.mxu0 0
    %2850 = vmatpush1.bf16.msra.mxu0 %v2815
    %2851 = vmatprep.subr.bf16.mxu0 0
    %2852 = vmatpush1.bf16.msra.mxu0 %v2814
    %2853 = vmatprep.subr.bf16.mxu0 0
    %2854 = vmatpush1.bf16.msra.mxu0 %v2813
    %2855 = vmatprep.subr.bf16.mxu0 0
    %2856 = vmatpush1.bf16.msra.mxu0 %v2812
    %2857 = vmatprep.subr.bf16.mxu0 0
    %2858 = vmatpush1.bf16.msra.mxu0 %v2811
    %2859 = vmatprep.subr.bf16.mxu0 0
    %2860 = vmatpush2.bf16.msra.mxu0 %v2826
    %2861 = vmatprep.subr.bf16.mxu0 0
    %2862 = vmatpush2.bf16.msra.mxu0 %v2825
    %2863 = vmatprep.subr.bf16.mxu0 0
    %2864 = vmatpush2.bf16.msra.mxu0 %v2824
    %2865 = vmatprep.subr.bf16.mxu0 0
    %2866 = vmatpush2.bf16.msra.mxu0 %v2823
    %2867 = vmatprep.subr.bf16.mxu0 0
    %2868 = vmatpush2.bf16.msra.mxu0 %v2822
    %2869 = vmatprep.subr.bf16.mxu0 0
    %2870 = vmatpush2.bf16.msra.mxu0 %v2821
    %2871 = vmatprep.subr.bf16.mxu0 0
    %2872 = vmatpush2.bf16.msra.mxu0 %v2820
    %2873 = vmatprep.subr.bf16.mxu0 0
    %2874 = vmatpush2.bf16.msra.mxu0 %v2819
    %2875 = vmatprep.mubr.bf16.mxu0 %v2707
    %2876 = vmatmul.mubr.bf16.gmra.mxu0 %v2706
    %v2877 = vpop.f32.mrf.mxu0
    %v2878 = vadd.f32 %v2745, %v2877
    %v2879 = vpop.f32.mrf.mxu0
    %v2880 = vpop.f32.mrf.mxu0
    %v2881 = vadd.f32 %v2745, %v2880
    %v2882 = vpop.f32.mrf.mxu0
    %2883 = vdwg.mxu0
    %2884 = vmax.xlane.f32.xlu0 %v2878
    %v2885 = vpop.xlane.xlu0 %2884
    %2886 = vmax.xlane.f32.xlu0 %v2881
    %v2887 = vpop.xlane.xlu0 %2886
    %v2888 = vsub.f32 %v2878, %v2885
    %v2889 = vsub.f32 %v2881, %v2887
    %v2890 = vmul.f32 %v2888, 1.442695
    %v2891 = vpow.pop %v2890
    %v2892 = vmul.f32 %v2889, 1.442695
    %v2893 = vpow.pop %v2892
    %2894 = vadd.xlane.f32.xlu0 %v2891
    %v2895 = vpop.xlane.xlu0 %2894
    %2896 = vadd.xlane.f32.xlu0 %v2893
    %v2897 = vpop.xlane.xlu0 %2896
    %v2898 = vrcp.pop %v2895
    %v2899 = vmul.f32 %v2891, %v2898
    %v2900 = vrcp.pop %v2897
    %v2901 = vmul.f32 %v2893, %v2900
    %2902 = vst [vmem:[%s7] sm:$0xff] %v2899
    %2903 = vst [vmem:[%s7 + $0x8] sm:$0xff] %v2901
    // Predicated region
    $region42: #{eegnet_forward.1} parent=1 // pred_check
      _
    $region43: #{eegnet_forward.1} parent=1 // pred_check_branch
      %2905 = sbr.rel (0) target = $region45
    $region44: #{eegnet_forward.1} parent=1 // pred_region
      _
    $region45: #{eegnet_forward.1} parent=1 // pred_fallthru
      _
    // Predicated region
    $region46: #{eegnet_forward.1} parent=1 // pred_check
      _
    $region47: #{eegnet_forward.1} parent=1 // pred_check_branch
      %2907 = sbr.rel (0) target = $region49
    $region48: #{eegnet_forward.1} parent=1 // pred_region
      _
    $region49: #{eegnet_forward.1} parent=1 // pred_fallthru
      _
    %2908 = vsyncpa [#allocation3], 1
    %2909 = vsyncpa [#allocation5], 1

</llo_original>
